<compile_context>
chip_gen: v7x
topology: tpu7x:2x2x1
jax: 0.10.0
libtpu: 0.0.40
codegen_flags: <defaults>
</compile_context>

<pallas_src>
from functools import partial

import jax
import jax.numpy as jnp
from jax.experimental import pallas as pl
from jax.experimental.pallas import tpu as pltpu


def _round_up(x, m):
    return ((x + m - 1) // m) * m


def _pick_vmem_limit():
    """Per-generation scoped-VMEM budget: ~half of physical, 32 MiB floor."""
    try:
        cap = int(pltpu.get_tpu_info().vmem_capacity_bytes)
    except Exception:                      # no device / old jax at trace time
        cap = 128 * 1024 * 1024
    return max(32 * 1024 * 1024, min(96 * 1024 * 1024, cap // 2))


_VMEM_LIMIT = _pick_vmem_limit()

# Default M-tile.  Sweep upward (4096-8192) on v7x: its 3.2 TB/s HBM needs
# ~2x v6e's per-step bytes to hide the same fixed grid-step cost; v5e prefers
# the low end (~2048).
_TM_MAX = 2048


def _choose_tm(m, tm_max):
    """Row tile: as large as allowed, but keep >=2 grid steps when possible so
    megacore (v7x) has work to shard and the DMA pipeline overlaps."""
    tm = min(tm_max, _round_up(max(pl.cdiv(m, 2), 8), 8))
    return max(tm, 8)


# ----------------------------------------------------------------------------
# im2col (tap-major, channel-minor), K already padded to the GEMM alignment
# ----------------------------------------------------------------------------
def _im2col(x, k, stride, padding, k_align=32):
    B, H, W, Cin = x.shape
    Ho = (H + 2 * padding - k) // stride + 1
    Wo = (W + 2 * padding - k) // stride + 1
    xp = jnp.pad(x, ((0, 0), (padding, padding), (padding, padding), (0, 0)))
    cols = [xp[:, dy:dy + Ho * stride:stride, dx:dx + Wo * stride:stride, :]
            for dy in range(k) for dx in range(k)]
    Kc = k * k * Cin
    Kp = _round_up(Kc, k_align)
    if Kp > Kc:                            # fold K padding into the concat
        cols.append(jnp.zeros((B, Ho, Wo, Kp - Kc), x.dtype))
    patches = jnp.concatenate(cols, axis=-1).reshape(B * Ho * Wo, Kp)
    return patches, Ho, Wo, Kc


# ----------------------------------------------------------------------------
# Pallas kernel: fused  out = act(A @ W + b)   (bf16 MXU operands, f32 epilogue)
# ----------------------------------------------------------------------------
def _fused_matmul_kernel(a_ref, w_ref, b_ref, o_ref, *, act, n_real):
    acc = jnp.dot(a_ref[...], w_ref[...], preferred_element_type=jnp.float32)
    acc = acc + b_ref[...]                       # (tm, Np) + (1, Np), f32
    if act == "silu":
        acc = acc * jax.nn.sigmoid(acc)          # YOLOv5 Conv activation
    elif act == "sigmoid":
        acc = jax.nn.sigmoid(acc)
    # Narrow store: only the real N columns go to HBM (no padded-lane write
    # amplification); allowed because the out block's last dim == full dim.
    o_ref[...] = acc[:, :n_real].astype(o_ref.dtype)


def fused_matmul(a, w, b, act="none", out_dtype=jnp.float32, tm_max=_TM_MAX):
    """act(a @ w + b): M-tiled grid, bf16 MXU inputs, real-width output store."""
    M, K = a.shape
    K2, N = w.shape
    assert K == K2
    Kp = _round_up(K, 32)                 # contraction alignment
    Np = _round_up(N, 128)                # lane-aligned weight operand for MXU
    tm = _choose_tm(M, tm_max)
    Mp = _round_up(M, tm)

    a_p = jnp.pad(a.astype(jnp.bfloat16), ((0, Mp - M), (0, Kp - K)))
    w_p = jnp.pad(w.astype(jnp.bfloat16), ((0, Kp - K), (0, Np - N)))
    b_p = jnp.pad(b.reshape(1, N).astype(jnp.float32), ((0, 0), (0, Np - N)))

    out = pl.pallas_call(
        partial(_fused_matmul_kernel, act=act, n_real=N),
        out_shape=jax.ShapeDtypeStruct((Mp, N), out_dtype),   # real bytes only
        grid=(Mp // tm,),
        in_specs=[
            pl.BlockSpec((tm, Kp), lambda i: (i, 0)),   # streaming A tiles
            pl.BlockSpec((Kp, Np), lambda i: (0, 0)),   # resident weights
            pl.BlockSpec((1, Np), lambda i: (0, 0)),    # resident bias
        ],
        out_specs=pl.BlockSpec((tm, N), lambda i: (i, 0)),
        compiler_params=pltpu.CompilerParams(
            dimension_semantics=("parallel",),          # megacore on v7x
            vmem_limit_bytes=_VMEM_LIMIT),
    )(a_p, w_p, b_p)
    return out[:M]


def conv2d_nhwc_pallas(x, weight, bias, stride, padding, act, out_dtype,
                       tm_max=_TM_MAX):
    """NHWC conv via im2col + fused Pallas GEMM.  weight: (Cout, Cin, k, k)."""
    B = x.shape[0]
    Cout, _, k, _ = weight.shape
    patches, Ho, Wo, Kc = _im2col(x, k, stride, padding)
    Kp = patches.shape[1]
    w_mat = weight.transpose(2, 3, 1, 0).reshape(Kc, Cout)
    w_mat = jnp.pad(w_mat, ((0, Kp - Kc), (0, 0)))
    y = fused_matmul(patches, w_mat, bias, act=act, out_dtype=out_dtype,
                     tm_max=tm_max)
    return y.reshape(B, Ho, Wo, Cout)              # stays NHWC


# ----------------------------------------------------------------------------
# Pallas kernel: conv2 GEMM + SiLU  ->  1x1 detect head + sigmoid + YOLO decode
# (the conv2 feature map never leaves VMEM)
# ----------------------------------------------------------------------------
def _conv_head_kernel(a_ref, w2_ref, b2_ref, wh_ref, bh_ref, gxy_ref, const_ref,
                      o_ref, *, stride_px, n_real):
    # conv2: GEMM + bias + SiLU (f32 epilogue, tile stays resident in VMEM)
    acc = jnp.dot(a_ref[...], w2_ref[...], preferred_element_type=jnp.float32)
    acc = acc + b2_ref[...]
    feat = acc * jax.nn.sigmoid(acc)                     # (tm, C2p) f32
    # detect head: second MXU dot on the same tile (padded lanes/rows are zero)
    y = jnp.dot(feat.astype(jnp.bfloat16), wh_ref[...],
                preferred_element_type=jnp.float32)
    y = jax.nn.sigmoid(y + bh_ref[...])                  # (tm, Np) f32
    # fused YOLOv5 decode (free VPU/EUP slots under the MXU)
    const = const_ref[...]                               # (4, Np) lane consts
    is_x, is_y = const[0:1, :], const[1:2, :]
    is_wh, anc = const[2:3, :], const[3:4, :]
    gxy = gxy_ref[...]                                   # (tm, 2) = [wo, ho]
    gx, gy = gxy[:, 0:1], gxy[:, 1:2]
    grid_add = is_x * gx + is_y * gy                     # (tm, Np)
    xy_dec = (y * 2.0 + grid_add - 0.5) * stride_px
    wh_dec = (y * 2.0) ** 2 * anc
    out = jnp.where(is_x + is_y > 0.5, xy_dec,
                    jnp.where(is_wh > 0.5, wh_dec, y))
    o_ref[...] = out[:, :n_real].astype(o_ref.dtype)     # narrow store


def conv_head_fused(x_nhwc, w2, b2, w3, b3, anchors, na, no, stride_px,
                    tm_max=_TM_MAX):
    """3x3/s2 SiLU conv + 1x1 detect head + decode in one fused Pallas pass."""
    B = x_nhwc.shape[0]
    C1 = x_nhwc.shape[-1]
    C2 = w2.shape[0]
    N = na * no
    patches, Ho, Wo, Kc = _im2col(x_nhwc, 3, 2, 1)       # bf16 patches
    M, Kp = patches.shape
    C2p = _round_up(C2, 128)
    Np = _round_up(N, 128)
    tm = _choose_tm(M, tm_max)
    Mp = _round_up(M, tm)

    # conv2 weights (Cout, Cin, 3, 3) -> (k*k*Cin, Cout), tap-major/chan-minor
    w2_mat = w2.transpose(2, 3, 1, 0).reshape(9 * C1, C2)
    w2_p = jnp.pad(w2_mat.astype(jnp.bfloat16),
                   ((0, Kp - 9 * C1), (0, C2p - C2)))
    b2_p = jnp.pad(b2.reshape(1, C2).astype(jnp.float32), ((0, 0), (0, C2p - C2)))
    # head weights (na*no, C2, 1, 1) -> (C2, na*no)
    wh_mat = w3.reshape(N, C2).T
    wh_p = jnp.pad(wh_mat.astype(jnp.bfloat16), ((0, C2p - C2), (0, Np - N)))
    bh_p = jnp.pad(b3.reshape(1, N).astype(jnp.float32), ((0, 0), (0, Np - N)))

    a_p = jnp.pad(patches.astype(jnp.bfloat16), ((0, Mp - M), (0, 0)))

    # Per-row (wo, ho) grid coords for the decode (row order is (b, ho, wo)).
    # TODO(synk): derive gx/gy in-kernel from program_id + iota to drop this
    # small streamed input (needs vector i32 div/mod lowering).
    yv, xv = jnp.meshgrid(jnp.arange(Ho, dtype=jnp.float32),
                          jnp.arange(Wo, dtype=jnp.float32), indexing="ij")
    gxy = jnp.broadcast_to(jnp.stack([xv, yv], axis=-1)[None],
                           (B, Ho, Wo, 2)).reshape(M, 2)
    gxy_p = jnp.pad(gxy, ((0, Mp - M), (0, 0)))

    # Per-lane decode constants: lane = anchor*no + channel (padded lanes inert)
    lane = jnp.arange(Np)
    a_idx = jnp.clip(lane // no, 0, na - 1)
    c_idx = lane % no
    valid = lane < N
    is_x = ((c_idx == 0) & valid).astype(jnp.float32)
    is_y = ((c_idx == 1) & valid).astype(jnp.float32)
    is_wh = (((c_idx == 2) | (c_idx == 3)) & valid).astype(jnp.float32)
    anc = jnp.where((c_idx == 2) & valid, anchors[a_idx, 0],
                    jnp.where((c_idx == 3) & valid, anchors[a_idx, 1],
                              0.0)).astype(jnp.float32)
    const = jnp.stack([is_x, is_y, is_wh, anc], axis=0)        # (4, Np)

    out = pl.pallas_call(
        partial(_conv_head_kernel, stride_px=float(stride_px), n_real=N),
        out_shape=jax.ShapeDtypeStruct((Mp, N), jnp.float32),
        grid=(Mp // tm,),
        in_specs=[
            pl.BlockSpec((tm, Kp), lambda i: (i, 0)),    # streaming patches
            pl.BlockSpec((Kp, C2p), lambda i: (0, 0)),   # resident conv2 W
            pl.BlockSpec((1, C2p), lambda i: (0, 0)),    # resident conv2 bias
            pl.BlockSpec((C2p, Np), lambda i: (0, 0)),   # resident head W
            pl.BlockSpec((1, Np), lambda i: (0, 0)),     # resident head bias
            pl.BlockSpec((tm, 2), lambda i: (i, 0)),     # per-row grid coords
            pl.BlockSpec((4, Np), lambda i: (0, 0)),     # decode lane constants
        ],
        out_specs=pl.BlockSpec((tm, N), lambda i: (i, 0)),
        compiler_params=pltpu.CompilerParams(
            dimension_semantics=("parallel",),
            vmem_limit_bytes=_VMEM_LIMIT),
    )(a_p, w2_p, b2_p, wh_p, bh_p, gxy_p, const)
    return out[:M], Ho, Wo


# ----------------------------------------------------------------------------
# DetectMultiBackend stand-in
# ----------------------------------------------------------------------------
class DetectMultiBackendPallas:
    def __init__(self, key, in_ch=3, c1=16, c2=32, na=3, nc=4, img_size=16):
        self.na, self.nc, self.no = na, nc, nc + 5
        self.stride = 4                                    # two stride-2 convs
        k0, k1, k2, k3, k4, k5 = jax.random.split(key, 6)
        # Conv stem 1: 3x3 s2, in_ch -> c1
        self.w1 = 0.1 * jax.random.normal(k0, (c1, in_ch, 3, 3), jnp.float32)
        self.b1 = 0.1 * jax.random.normal(k1, (c1,), jnp.float32)
        # Conv stem 2: 3x3 s2, c1 -> c2
        self.w2 = 0.1 * jax.random.normal(k2, (c2, c1, 3, 3), jnp.float32)
        self.b2 = 0.1 * jax.random.normal(k3, (c2,), jnp.float32)
        # Detect head: 1x1, c2 -> na*(5+nc)
        self.w3 = 0.1 * jax.random.normal(k4, (na * self.no, c2, 1, 1), jnp.float32)
        self.b3 = 0.1 * jax.random.normal(k5, (na * self.no,), jnp.float32)
        # fixed anchors (pixels)
        self.anchors = jnp.array([[10., 13.], [16., 30.], [33., 23.]],
                                 dtype=jnp.float32)        # (na, 2)

    def __call__(self, im):
        """im: (B, C, H, W) float32 NCHW -> (B, na*Ho*Wo, 5+nc)."""
        B = im.shape[0]
        # single NCHW->NHWC transpose + bf16 cast at entry: im2col and all GEMM
        # inputs stay bf16; bias / activation / decode epilogues stay f32.
        x = im.transpose(0, 2, 3, 1).astype(jnp.bfloat16)
        x = conv2d_nhwc_pallas(x, self.w1, self.b1, 2, 1, "silu", jnp.bfloat16)
        # conv2 + detect head + decode fused (feature map never hits HBM)
        y, Ho, Wo = conv_head_fused(x, self.w2, self.b2, self.w3, self.b3,
                                    self.anchors, self.na, self.no, self.stride)
        p = y.reshape(B, Ho, Wo, self.na, self.no).transpose(0, 3, 1, 2, 4)
        return p.reshape(B, self.na * Ho * Wo, self.no)


if __name__ == "__main__":
    key = jax.random.PRNGKey(0)
    kp, kx = jax.random.split(key)
    model = DetectMultiBackendPallas(kp, in_ch=3, c1=16, c2=32,
                                     na=3, nc=4, img_size=16)
    # NCHW input image, small shape: (batch=2, channels=3, 16, 16)
    im = jax.random.uniform(kx, (2, 3, 16, 16), jnp.float32)
    fwd = jax.jit(model.__call__)
    y = jax.block_until_ready(fwd(im))
    assert y.shape == (2, 3 * 4 * 4, 9), y.shape
    assert bool(jnp.all(jnp.isfinite(y)))
    print("KERNEL_OK")
</pallas_src>

<mosaic_0001>
module attributes {stable_mosaic.version = 11 : i64} {
  func.func @_fused_matmul_kernel(%arg0: i32, %arg1: memref<64x32xbf16, #tpu.memory_space<vmem>>, %arg2: memref<32x128xbf16, #tpu.memory_space<vmem>>, %arg3: memref<1x128xf32, #tpu.memory_space<vmem>>, %arg4: memref<64x16xbf16, #tpu.memory_space<vmem>>) attributes {dimension_semantics = [#tpu.dimension_semantics<parallel>], iteration_bounds = array<i64: 2>, scalar_prefetch = 0 : i64, scratch_operands = 0 : i64, tpu.core_type = #tpu.core_type<tc>, window_params = [{transform_indices = @transform_0, window_bounds = array<i64: 64, 32>}, {pipeline_mode = #tpu.pipeline_mode<synchronous>, transform_indices = @transform_1, window_bounds = array<i64: 32, 128>}, {pipeline_mode = #tpu.pipeline_mode<synchronous>, transform_indices = @transform_2, window_bounds = array<i64: 1, 128>}, {transform_indices = @transform_3, window_bounds = array<i64: 64, 16>}]} {
    %c0 = arith.constant 0 : index
    %c0_0 = arith.constant 0 : index
    %0 = vector.load %arg1[%c0, %c0_0] : memref<64x32xbf16, #tpu.memory_space<vmem>>, vector<64x32xbf16>
    %c0_1 = arith.constant 0 : index
    %c0_2 = arith.constant 0 : index
    %1 = vector.load %arg2[%c0_1, %c0_2] : memref<32x128xbf16, #tpu.memory_space<vmem>>, vector<32x128xbf16>
    %cst = arith.constant dense<0.000000e+00> : vector<64x128xf32>
    %2 = tpu.matmul %0, %1, %cst {dimension_numbers = #tpu.dot_dimension_numbers<[1], [0], [0], [1], [0, 0, 1, 1], [], []>} : vector<64x32xbf16>, vector<32x128xbf16>, vector<64x128xf32> -> vector<64x128xf32>
    %c0_3 = arith.constant 0 : index
    %c0_4 = arith.constant 0 : index
    %3 = vector.load %arg3[%c0_3, %c0_4] : memref<1x128xf32, #tpu.memory_space<vmem>>, vector<1x128xf32>
    %4 = vector.broadcast %3 : vector<1x128xf32> to vector<64x128xf32>
    %5 = arith.addf %2, %4 : vector<64x128xf32>
    %6 = arith.negf %5 : vector<64x128xf32>
    %7 = math.exp %6 : vector<64x128xf32>
    %cst_5 = arith.constant 1.000000e+00 : f32
    %8 = vector.broadcast %cst_5 : f32 to vector<64x128xf32>
    %9 = arith.addf %8, %7 : vector<64x128xf32>
    %10 = arith.divf %8, %9 : vector<64x128xf32>
    %11 = arith.mulf %5, %10 : vector<64x128xf32>
    %12 = vector.extract_strided_slice %11 {offsets = [0, 0], sizes = [64, 16], strides = [1, 1]} : vector<64x128xf32> to vector<64x16xf32>
    %13 = arith.truncf %12 : vector<64x16xf32> to vector<64x16xbf16>
    %c0_6 = arith.constant 0 : index
    %c0_7 = arith.constant 0 : index
    %14 = vector.load %arg4[%c0_6, %c0_7] : memref<64x16xbf16, #tpu.memory_space<vmem>>, vector<64x16xbf16>
    tpu.vector_store %arg4[%c0_6, %c0_7], %13 {strides = array<i32>} : memref<64x16xbf16, #tpu.memory_space<vmem>>, vector<64x16xbf16>,
    return
  }
  func.func @transform_0(%arg0: i32) -> (i32, i32) {
    %c0_i32 = arith.constant 0 : i32
    %c0_i32_0 = arith.constant 0 : i32
    return %arg0, %c0_i32 : i32, i32
  }
  func.func @transform_1(%arg0: i32) -> (i32, i32) {
    %c0_i32 = arith.constant 0 : i32
    %c0_i32_0 = arith.constant 0 : i32
    %c0_i32_1 = arith.constant 0 : i32
    return %c0_i32, %c0_i32_0 : i32, i32
  }
  func.func @transform_2(%arg0: i32) -> (i32, i32) {
    %c0_i32 = arith.constant 0 : i32
    %c0_i32_0 = arith.constant 0 : i32
    %c0_i32_1 = arith.constant 0 : i32
    return %c0_i32, %c0_i32_0 : i32, i32
  }
  func.func @transform_3(%arg0: i32) -> (i32, i32) {
    %c0_i32 = arith.constant 0 : i32
    %c0_i32_0 = arith.constant 0 : i32
    return %arg0, %c0_i32 : i32, i32
  }
}

module attributes {stable_mosaic.version = 11 : i64} {
  func.func @_conv_head_kernel(%arg0: i32, %arg1: memref<16x160xbf16, #tpu.memory_space<vmem>>, %arg2: memref<160x128xbf16, #tpu.memory_space<vmem>>, %arg3: memref<1x128xf32, #tpu.memory_space<vmem>>, %arg4: memref<128x128xbf16, #tpu.memory_space<vmem>>, %arg5: memref<1x128xf32, #tpu.memory_space<vmem>>, %arg6: memref<16x2xf32, #tpu.memory_space<vmem>>, %arg7: memref<4x128xf32, #tpu.memory_space<vmem>>, %arg8: memref<16x27xf32, #tpu.memory_space<vmem>>) attributes {dimension_semantics = [#tpu.dimension_semantics<parallel>], iteration_bounds = array<i64: 2>, scalar_prefetch = 0 : i64, scratch_operands = 0 : i64, tpu.core_type = #tpu.core_type<tc>, window_params = [{transform_indices = @transform_0, window_bounds = array<i64: 16, 160>}, {pipeline_mode = #tpu.pipeline_mode<synchronous>, transform_indices = @transform_1, window_bounds = array<i64: 160, 128>}, {pipeline_mode = #tpu.pipeline_mode<synchronous>, transform_indices = @transform_2, window_bounds = array<i64: 1, 128>}, {pipeline_mode = #tpu.pipeline_mode<synchronous>, transform_indices = @transform_3, window_bounds = array<i64: 128, 128>}, {pipeline_mode = #tpu.pipeline_mode<synchronous>, transform_indices = @transform_4, window_bounds = array<i64: 1, 128>}, {transform_indices = @transform_5, window_bounds = array<i64: 16, 2>}, {pipeline_mode = #tpu.pipeline_mode<synchronous>, transform_indices = @transform_6, window_bounds = array<i64: 4, 128>}, {transform_indices = @transform_7, window_bounds = array<i64: 16, 27>}]} {
    %c0 = arith.constant 0 : index
    %c0_0 = arith.constant 0 : index
    %0 = vector.load %arg1[%c0, %c0_0] : memref<16x160xbf16, #tpu.memory_space<vmem>>, vector<16x160xbf16>
    %c0_1 = arith.constant 0 : index
    %c0_2 = arith.constant 0 : index
    %1 = vector.load %arg2[%c0_1, %c0_2] : memref<160x128xbf16, #tpu.memory_space<vmem>>, vector<160x128xbf16>
    %cst = arith.constant dense<0.000000e+00> : vector<16x128xf32>
    %2 = tpu.matmul %0, %1, %cst {dimension_numbers = #tpu.dot_dimension_numbers<[1], [0], [0], [1], [0, 0, 1, 1], [], []>} : vector<16x160xbf16>, vector<160x128xbf16>, vector<16x128xf32> -> vector<16x128xf32>
    %c0_3 = arith.constant 0 : index
    %c0_4 = arith.constant 0 : index
    %3 = vector.load %arg3[%c0_3, %c0_4] : memref<1x128xf32, #tpu.memory_space<vmem>>, vector<1x128xf32>
    %4 = vector.broadcast %3 : vector<1x128xf32> to vector<16x128xf32>
    %5 = arith.addf %2, %4 : vector<16x128xf32>
    %6 = arith.negf %5 : vector<16x128xf32>
    %7 = math.exp %6 : vector<16x128xf32>
    %cst_5 = arith.constant 1.000000e+00 : f32
    %8 = vector.broadcast %cst_5 : f32 to vector<16x128xf32>
    %9 = arith.addf %8, %7 : vector<16x128xf32>
    %10 = arith.divf %8, %9 : vector<16x128xf32>
    %11 = arith.mulf %5, %10 : vector<16x128xf32>
    %12 = arith.truncf %11 : vector<16x128xf32> to vector<16x128xbf16>
    %c0_6 = arith.constant 0 : index
    %c0_7 = arith.constant 0 : index
    %13 = vector.load %arg4[%c0_6, %c0_7] : memref<128x128xbf16, #tpu.memory_space<vmem>>, vector<128x128xbf16>
    %cst_8 = arith.constant dense<0.000000e+00> : vector<16x128xf32>
    %14 = tpu.matmul %12, %13, %cst_8 {dimension_numbers = #tpu.dot_dimension_numbers<[1], [0], [0], [1], [0, 0, 1, 1], [], []>} : vector<16x128xbf16>, vector<128x128xbf16>, vector<16x128xf32> -> vector<16x128xf32>
    %c0_9 = arith.constant 0 : index
    %c0_10 = arith.constant 0 : index
    %15 = vector.load %arg5[%c0_9, %c0_10] : memref<1x128xf32, #tpu.memory_space<vmem>>, vector<1x128xf32>
    %16 = vector.broadcast %15 : vector<1x128xf32> to vector<16x128xf32>
    %17 = arith.addf %14, %16 : vector<16x128xf32>
    %18 = arith.negf %17 : vector<16x128xf32>
    %19 = math.exp %18 : vector<16x128xf32>
    %cst_11 = arith.constant 1.000000e+00 : f32
    %20 = vector.broadcast %cst_11 : f32 to vector<16x128xf32>
    %21 = arith.addf %20, %19 : vector<16x128xf32>
    %22 = arith.divf %20, %21 : vector<16x128xf32>
    %c0_12 = arith.constant 0 : index
    %c0_13 = arith.constant 0 : index
    %23 = vector.load %arg7[%c0_12, %c0_13] : memref<4x128xf32, #tpu.memory_space<vmem>>, vector<4x128xf32>
    %24 = vector.extract_strided_slice %23 {offsets = [0, 0], sizes = [1, 128], strides = [1, 1]} : vector<4x128xf32> to vector<1x128xf32>
    %25 = vector.extract_strided_slice %23 {offsets = [1, 0], sizes = [1, 128], strides = [1, 1]} : vector<4x128xf32> to vector<1x128xf32>
    %26 = vector.extract_strided_slice %23 {offsets = [2, 0], sizes = [1, 128], strides = [1, 1]} : vector<4x128xf32> to vector<1x128xf32>
    %27 = vector.extract_strided_slice %23 {offsets = [3, 0], sizes = [1, 128], strides = [1, 1]} : vector<4x128xf32> to vector<1x128xf32>
    %c0_14 = arith.constant 0 : index
    %c0_15 = arith.constant 0 : index
    %28 = vector.load %arg6[%c0_14, %c0_15] : memref<16x2xf32, #tpu.memory_space<vmem>>, vector<16x2xf32>
    %29 = vector.extract_strided_slice %28 {offsets = [0, 0], sizes = [16, 1], strides = [1, 1]} : vector<16x2xf32> to vector<16x1xf32>
    %30 = vector.extract_strided_slice %28 {offsets = [0, 1], sizes = [16, 1], strides = [1, 1]} : vector<16x2xf32> to vector<16x1xf32>
    %31 = vector.broadcast %24 : vector<1x128xf32> to vector<16x128xf32>
    %32 = vector.broadcast %29 : vector<16x1xf32> to vector<16x128xf32>
    %33 = arith.mulf %31, %32 : vector<16x128xf32>
    %34 = vector.broadcast %25 : vector<1x128xf32> to vector<16x128xf32>
    %35 = vector.broadcast %30 : vector<16x1xf32> to vector<16x128xf32>
    %36 = arith.mulf %34, %35 : vector<16x128xf32>
    %37 = arith.addf %33, %36 : vector<16x128xf32>
    %cst_16 = arith.constant 2.000000e+00 : f32
    %38 = vector.broadcast %cst_16 : f32 to vector<16x128xf32>
    %39 = arith.mulf %22, %38 : vector<16x128xf32>
    %40 = arith.addf %39, %37 : vector<16x128xf32>
    %cst_17 = arith.constant 5.000000e-01 : f32
    %41 = vector.broadcast %cst_17 : f32 to vector<16x128xf32>
    %42 = arith.subf %40, %41 : vector<16x128xf32>
    %cst_18 = arith.constant 4.000000e+00 : f32
    %43 = vector.broadcast %cst_18 : f32 to vector<16x128xf32>
    %44 = arith.mulf %42, %43 : vector<16x128xf32>
    %cst_19 = arith.constant 2.000000e+00 : f32
    %45 = vector.broadcast %cst_19 : f32 to vector<16x128xf32>
    %46 = arith.mulf %22, %45 : vector<16x128xf32>
    %47 = arith.mulf %46, %46 : vector<16x128xf32>
    %48 = vector.broadcast %27 : vector<1x128xf32> to vector<16x128xf32>
    %49 = arith.mulf %47, %48 : vector<16x128xf32>
    %50 = arith.addf %24, %25 : vector<1x128xf32>
    %cst_20 = arith.constant 5.000000e-01 : f32
    %51 = vector.broadcast %cst_20 : f32 to vector<1x128xf32>
    %52 = arith.cmpf ogt, %50, %51 : vector<1x128xf32>
    %cst_21 = arith.constant 5.000000e-01 : f32
    %53 = vector.broadcast %cst_21 : f32 to vector<1x128xf32>
    %54 = arith.cmpf ogt, %26, %53 : vector<1x128xf32>
    %55 = vector.shape_cast %54 : vector<1x128xi1> to vector<1x128xi1>
    %56 = vector.broadcast %55 : vector<1x128xi1> to vector<16x128xi1>
    %57 = arith.select %56, %49, %22 : vector<16x128xi1>, vector<16x128xf32>
    %58 = vector.shape_cast %52 : vector<1x128xi1> to vector<1x128xi1>
    %59 = vector.broadcast %58 : vector<1x128xi1> to vector<16x128xi1>
    %60 = arith.select %59, %44, %57 : vector<16x128xi1>, vector<16x128xf32>
    %61 = vector.extract_strided_slice %60 {offsets = [0, 0], sizes = [16, 27], strides = [1, 1]} : vector<16x128xf32> to vector<16x27xf32>
    %c0_22 = arith.constant 0 : index
    %c0_23 = arith.constant 0 : index
    %62 = vector.load %arg8[%c0_22, %c0_23] : memref<16x27xf32, #tpu.memory_space<vmem>>, vector<16x27xf32>
    tpu.vector_store %arg8[%c0_22, %c0_23], %61 {strides = array<i32>} : memref<16x27xf32, #tpu.memory_space<vmem>>, vector<16x27xf32>,
    return
  }
  func.func @transform_0(%arg0: i32) -> (i32, i32) {
    %c0_i32 = arith.constant 0 : i32
    %c0_i32_0 = arith.constant 0 : i32
    return %arg0, %c0_i32 : i32, i32
  }
  func.func @transform_1(%arg0: i32) -> (i32, i32) {
    %c0_i32 = arith.constant 0 : i32
    %c0_i32_0 = arith.constant 0 : i32
    %c0_i32_1 = arith.constant 0 : i32
    return %c0_i32, %c0_i32_0 : i32, i32
  }
  func.func @transform_2(%arg0: i32) -> (i32, i32) {
    %c0_i32 = arith.constant 0 : i32
    %c0_i32_0 = arith.constant 0 : i32
    %c0_i32_1 = arith.constant 0 : i32
    return %c0_i32, %c0_i32_0 : i32, i32
  }
  func.func @transform_3(%arg0: i32) -> (i32, i32) {
    %c0_i32 = arith.constant 0 : i32
    %c0_i32_0 = arith.constant 0 : i32
    %c0_i32_1 = arith.constant 0 : i32
    return %c0_i32, %c0_i32_0 : i32, i32
  }
  func.func @transform_4(%arg0: i32) -> (i32, i32) {
    %c0_i32 = arith.constant 0 : i32
    %c0_i32_0 = arith.constant 0 : i32
    %c0_i32_1 = arith.constant 0 : i32
    return %c0_i32, %c0_i32_0 : i32, i32
  }
  func.func @transform_5(%arg0: i32) -> (i32, i32) {
    %c0_i32 = arith.constant 0 : i32
    %c0_i32_0 = arith.constant 0 : i32
    return %arg0, %c0_i32 : i32, i32
  }
  func.func @transform_6(%arg0: i32) -> (i32, i32) {
    %c0_i32 = arith.constant 0 : i32
    %c0_i32_0 = arith.constant 0 : i32
    %c0_i32_1 = arith.constant 0 : i32
    return %c0_i32, %c0_i32_0 : i32, i32
  }
  func.func @transform_7(%arg0: i32) -> (i32, i32) {
    %c0_i32 = arith.constant 0 : i32
    %c0_i32_0 = arith.constant 0 : i32
    return %arg0, %c0_i32 : i32, i32
  }
}

</mosaic_0001>

<llo_original>
// kernel: a_call__.2
$region0: #{a_call__.2}
  #allocation0 [shape = 'u32[]', space=smem, size = 0x4, offset = 0x4, fixed_abs, tag = 'smem constant byte address 0x4 - core index']
  #allocation1 [shape = 'u32[144,128]{1,0:T(1,128)}', space=vmem, size = 0x12000, scoped, tag = 'internal scratch']
  %s0 = inlined_call_operand.hbm [shape: bf16[128,32], index: 0, kind: input, shape index: {}]
  %s1 = inlined_call_operand.hbm [shape: bf16[32,128], index: 1, kind: input, shape index: {}]
  %s2 = inlined_call_operand.hbm [shape: f32[1,128], index: 2, kind: input, shape index: {}]
  %s3 = inlined_call_operand.hbm [shape: bf16[128,16], index: 3, kind: output, shape index: {}]
  %s4 = sld [smem:[#allocation0]]
  $region57: #{a_call__.2} parent=0
    _
  %s6 = ssub.s32 1, %s4
  %s7 = scalar_select 0, %s6, %s4
  $region1: #{a_call__.2} parent=0
    #allocation2 [shape = 'u8[32768]{0}', space=vmem, size = 0x8000, scoped, tag = 'input window, operand 0']
    #allocation3 [shape = 's32[2]{0}', space=sflag, size = 0x8, scoped, tag = 'scoped memory for a_call__.2']
    #allocation4 [shape = 's32[2]{0}', space=sflag, size = 0x8, scoped, tag = 'scoped memory for a_call__.2']
    #allocation5 [shape = 'u8[8192]{0}', space=vmem, size = 0x2000, scoped, tag = 'input window, operand 1, single buffered']
    #allocation6 [shape = 's32[1]{0}', space=sflag, size = 0x4, scoped, tag = 'scoped memory for a_call__.2']
    #allocation7 [shape = 'u8[512]{0}', space=vmem, size = 0x400, scoped, tag = 'input window, operand 2, single buffered']
    #allocation8 [shape = 'u8[32768]{0}', space=vmem, size = 0x8000, scoped, tag = 'output window, operand 0']
    %8 = vsyncpa [#allocation3], 0
    %s9 = scalar_lea.sflag [#allocation3], 1
    %10 = vsyncpa %s9, 0
    %11 = vsyncpa [#allocation6], 0
    %12 = vsyncpa [#allocation4], 0
    %s13 = scalar_lea.sflag [#allocation4], 1
    %14 = vsyncpa %s13, 0
    loop: start=0, step=1, limit=4
    $region2: #{a_call__.2} parent=1 // loop_pre_header
      _
    $region3: #{a_call__.2} parent=1 // loop_header
      %s16 = sphi 0, %s20
      %p17 = scmp.ge.s32.totalorder %s16, 4
      %s26 = sphi 0, %s28
      %s29 = sphi 0, %s26
      %s30 = sphi 0, %s29
      %s46 = sphi 0, %s30
      %s50 = sphi 0, %s50
      %s52 = sphi 0, %s50
      %s53 = sphi 0, %s52
      %s67 = sphi 0, %s53
      %s71 = sphi 0, %s71
      %s73 = sphi 0, %s71
      %s74 = sphi 0, %s73
      %s88 = sphi 0, %s74
      %s94 = sphi 0, %s96
      %s97 = sphi 0, %s94
      %s98 = sphi 0, %s97
      %s114 = sphi 0, %s98
    $region4: #{a_call__.2} parent=1 // loop_header_branch
      %19 = sbr.rel (%p17) target = $region8
    $region5: #{a_call__.2} parent=1 // loop_body
      %s21 = ssub.s32 %s16, 1
      %s22 = ssub.s32 %s16, 2
      %s23 = sadd.s32 %s16, 1
      %s24 = ssub.s32 %s16, %s23
      %p25 = scmp.eq.s32.totalorder %s24, 0
      %s27 = sadd.s32 %s26, 1
      %s28 = scalar_select %p25, %s26, %s27
      %p31 = pneg %p25
      %p32 = scmp.eq.s32.totalorder %s16, 1
      %p33 = por %p31, %p32
      %p34 = scmp.ne.s32.totalorder %s26, %s29
      %p35 = scmp.eq.s32.totalorder %s16, 0
      %p36 = por %p34, %p35
      %p37 = scmp.ne.s32.totalorder %s26, %s29
      %p38 = scmp.eq.s32.totalorder %s21, 1
      %p39 = por %p37, %p38
      %p40 = scmp.ne.s32.totalorder %s29, %s30
      %p41 = scmp.eq.s32.totalorder %s21, 0
      %p42 = por %p40, %p41
      %p43 = scmp.ne.s32.totalorder %s29, %s30
      %p44 = scmp.eq.s32.totalorder %s22, 1
      %p45 = por %p43, %p44
      %p47 = scmp.ne.s32.totalorder %s30, %s46
      %p48 = scmp.eq.s32.totalorder %s22, 0
      %p49 = por %p47, %p48
      %s51 = sadd.s32 %s50, 1
      %p54 = scmp.eq.s32.totalorder %s16, 1
      %p55 = scmp.ne.s32.totalorder %s50, %s52
      %p56 = scmp.eq.s32.totalorder %s16, 0
      %p57 = por %p55, %p56
      %p58 = scmp.ne.s32.totalorder %s50, %s52
      %p59 = scmp.eq.s32.totalorder %s21, 1
      %p60 = por %p58, %p59
      %p61 = scmp.ne.s32.totalorder %s52, %s53
      %p62 = scmp.eq.s32.totalorder %s21, 0
      %p63 = por %p61, %p62
      %p64 = scmp.ne.s32.totalorder %s52, %s53
      %p65 = scmp.eq.s32.totalorder %s22, 1
      %p66 = por %p64, %p65
      %p68 = scmp.ne.s32.totalorder %s53, %s67
      %p69 = scmp.eq.s32.totalorder %s22, 0
      %p70 = por %p68, %p69
      %s72 = sadd.s32 %s71, 1
      %p75 = scmp.eq.s32.totalorder %s16, 1
      %p76 = scmp.ne.s32.totalorder %s71, %s73
      %p77 = scmp.eq.s32.totalorder %s16, 0
      %p78 = por %p76, %p77
      %p79 = scmp.ne.s32.totalorder %s71, %s73
      %p80 = scmp.eq.s32.totalorder %s21, 1
      %p81 = por %p79, %p80
      %p82 = scmp.ne.s32.totalorder %s73, %s74
      %p83 = scmp.eq.s32.totalorder %s21, 0
      %p84 = por %p82, %p83
      %p85 = scmp.ne.s32.totalorder %s73, %s74
      %p86 = scmp.eq.s32.totalorder %s22, 1
      %p87 = por %p85, %p86
      %p89 = scmp.ne.s32.totalorder %s74, %s88
      %p90 = scmp.eq.s32.totalorder %s22, 0
      %p91 = por %p89, %p90
      %s92 = ssub.s32 %s16, %s23
      %p93 = scmp.eq.s32.totalorder %s92, 0
      %s95 = sadd.s32 %s94, 1
      %s96 = scalar_select %p93, %s94, %s95
      %p99 = pneg %p93
      %p100 = scmp.eq.s32.totalorder %s16, 1
      %p101 = por %p99, %p100
      %p102 = scmp.ne.s32.totalorder %s94, %s97
      %p103 = scmp.eq.s32.totalorder %s16, 0
      %p104 = por %p102, %p103
      %p105 = scmp.ne.s32.totalorder %s94, %s97
      %p106 = scmp.eq.s32.totalorder %s21, 1
      %p107 = por %p105, %p106
      %p108 = scmp.ne.s32.totalorder %s97, %s98
      %p109 = scmp.eq.s32.totalorder %s21, 0
      %p110 = por %p108, %p109
      %p111 = scmp.ne.s32.totalorder %s97, %s98
      %p112 = scmp.eq.s32.totalorder %s22, 1
      %p113 = por %p111, %p112
      %p115 = scmp.ne.s32.totalorder %s98, %s114
      %p116 = scmp.eq.s32.totalorder %s22, 0
      %p117 = por %p115, %p116
      %p118 = scmp.le.s32.totalorder 1, %s16
      %p119 = scmp.lt.s32.totalorder %s16, 3
      %p120 = pnand %p118, %p119
      %p121 = pneg %p120
      // Predicated region
      $region9: #{a_call__.2} parent=5 // pred_check
        _
      $region10: #{a_call__.2} parent=5 // pred_check_branch
        %123 = sbr.rel (%p120) target = $region12
      $region11: #{a_call__.2} parent=5 // pred_region
        %s124 = ssub.s32 %s16, 1
        // Predicated region
        $region13: #{a_call__.2} parent=11 // pred_check
          %p125 = pneg %p63
        $region14: #{a_call__.2} parent=11 // pred_check_branch
          %127 = sbr.rel (%p125) target = $region16
        $region15: #{a_call__.2} parent=11 // pred_region
          %s129 = ssub.s32 256, 256
          %130 = vsyncadd [#allocation6], %s129
          %s131 = sshll.u32 [#allocation5], 4
          %s132 = int_to_ptr.vmem [resolvable:$true] %s131
          %137 = dma.hbm_to_vmem [thread:$0]  %s1, 256, %s132, [#allocation6], 64, 64, 4
        $region16: #{a_call__.2} parent=11 // pred_fallthru
          _
        // Predicated region
        $region17: #{a_call__.2} parent=11 // pred_check
          %p138 = pneg %p84
        $region18: #{a_call__.2} parent=11 // pred_check_branch
          %140 = sbr.rel (%p138) target = $region20
        $region19: #{a_call__.2} parent=11 // pred_region
          %s142 = ssub.s32 16, 16
          %143 = vsyncadd [#allocation6], %s142
          %s145 = sshll.u32 [#allocation7], 4
          %s146 = int_to_ptr.vmem [resolvable:$true] %s145
          %148 = dma.hbm_to_vmem [thread:$0]  %s2, 16, %s146, [#allocation6]
        $region20: #{a_call__.2} parent=11 // pred_fallthru
          _
      $region12: #{a_call__.2} parent=5 // pred_fallthru
        _
      %p149 = scmp.lt.s32.totalorder %s16, 2
      // Predicated region
      $region21: #{a_call__.2} parent=5 // pred_check
        %p150 = pneg %p149
      $region22: #{a_call__.2} parent=5 // pred_check_branch
        %152 = sbr.rel (%p150) target = $region24
      $region23: #{a_call__.2} parent=5 // pred_region
        // Predicated region
        $region25: #{a_call__.2} parent=23 // pred_check
          %p153 = pneg %p36
        $region26: #{a_call__.2} parent=23 // pred_check_branch
          %155 = sbr.rel (%p153) target = $region28
        $region27: #{a_call__.2} parent=23 // pred_region
          %s156 = sand.u32 %s26, 1
          %s157 = scalar_lea.sflag [#allocation3], %s156
          %s158 = sand.u32 %s26, 1
          %s159 = smul.addr %s158, 32
          %s160 = scalar_lea.vmem [#allocation2], %s159
          %s161 = smul.u32 8, %s16
          %s163 = ssub.s32 512, 512
          %164 = vsyncadd %s157, %s163
          %s165 = smul.addr %s161, 64
          %s166 = scalar_lea.hbm %s0, %s165
          %s167 = sshll.u32 %s160, 4
          %s168 = int_to_ptr.vmem [resolvable:$true] %s167
          %173 = dma.hbm_to_vmem [thread:$0]  %s166, 512, %s168, %s157, 64, 64, 4
        $region28: #{a_call__.2} parent=23 // pred_fallthru
          _
      $region24: #{a_call__.2} parent=5 // pred_fallthru
        _
      %p174 = scmp.le.s32.totalorder 1, %s16
      %p175 = scmp.lt.s32.totalorder %s16, 3
      %p176 = pnand %p174, %p175
      %p177 = pneg %p176
      // Predicated region
      $region29: #{a_call__.2} parent=5 // pred_check
        _
      $region30: #{a_call__.2} parent=5 // pred_check_branch
        %179 = sbr.rel (%p176) target = $region32
      $region31: #{a_call__.2} parent=5 // pred_region
        %s180 = ssub.s32 %s16, 1
        %s181 = sand.u32 %s29, 1
        %s182 = scalar_lea.sflag [#allocation3], %s181
        %s183 = sand.u32 %s29, 1
        %s184 = smul.addr %s183, 32
        %s185 = scalar_lea.vmem [#allocation2], %s184
        // Predicated region
        $region33: #{a_call__.2} parent=31 // pred_check
          %p186 = pneg %p42
        $region34: #{a_call__.2} parent=31 // pred_check_branch
          %188 = sbr.rel (%p186) target = $region36
        $region35: #{a_call__.2} parent=31 // pred_region
          %189 = dma.done %s182, 512
        $region36: #{a_call__.2} parent=31 // pred_fallthru
          _
        // Predicated region
        $region37: #{a_call__.2} parent=31 // pred_check
          %p190 = pneg %p63
        $region38: #{a_call__.2} parent=31 // pred_check_branch
          %192 = sbr.rel (%p190) target = $region40
        $region39: #{a_call__.2} parent=31 // pred_region
          %193 = dma.done [#allocation6], 256
        $region40: #{a_call__.2} parent=31 // pred_fallthru
          _
        // Predicated region
        $region41: #{a_call__.2} parent=31 // pred_check
          %p194 = pneg %p84
        $region42: #{a_call__.2} parent=31 // pred_check_branch
          %196 = sbr.rel (%p194) target = $region44
        $region43: #{a_call__.2} parent=31 // pred_region
          %197 = dma.done [#allocation6], 16
        $region44: #{a_call__.2} parent=31 // pred_fallthru
          _
        %s198 = sand.u32 %s29, 1
        %s199 = scalar_lea.sflag [#allocation3], %s198
        %s200 = sand.u32 %s29, 1
        %s201 = smul.addr %s200, 32
        %s202 = scalar_lea.vmem [#allocation2], %s201
        %p203 = pneg %p42
        %p204 = pneg %p39
        %p205 = pneg %p63
        %p206 = pneg %p60
        %p207 = pneg %p84
        %p208 = pneg %p81
        %p209 = pneg %p110
        %p210 = pneg %p107
        %s211 = sand.u32 %s97, 1
        %s212 = scalar_lea.sflag [#allocation4], %s211
        %s213 = sand.u32 %s97, 1
        %s214 = smul.addr %s213, 32
        %s215 = scalar_lea.vmem [#allocation8], %s214
        %s216 = smul.u32 8, %s21
        %s217 = smul.u32 8, %s21
        %v219 = vld [vmem:[%s185] sm:$0xf]
        %v220 = vld [vmem:[%s185 + $0x4] sm:$0xf]
        %v221 = vld [vmem:[%s185 + $0x8] sm:$0xf]
        %v222 = vld [vmem:[%s185 + $0xc] sm:$0xf]
        %v223 = vld [vmem:[%s185 + $0x10] sm:$0xf]
        %v224 = vld [vmem:[%s185 + $0x14] sm:$0xf]
        %v225 = vld [vmem:[%s185 + $0x18] sm:$0xf]
        %v226 = vld [vmem:[%s185 + $0x1c] sm:$0xf]
        %v227 = vld [vmem:[#allocation5] sm:$0xf]
        %v228 = vld [vmem:[#allocation5 + $0x4] sm:$0xf]
        %v229 = vld [vmem:[#allocation5 + $0x8] sm:$0xf]
        %v230 = vld [vmem:[#allocation5 + $0xc] sm:$0xf]
        %v231 = vld [vmem:[#allocation7] sm:$0x1]
        %v233 = vlaneseq
        %v234 = vshrl.u32 %v233, 7
        %v235 = vsub.s32 0, %v234
        %v236 = vrot.slane %v231, %v235
        %v246 = vunpack.c.l.b16 %v219
        %v247 = vunpack.c.l.b16 %v220
        %v248 = vunpack.c.l.b16 %v221
        %v249 = vunpack.c.l.b16 %v222
        %v250 = vunpack.c.l.b16 %v223
        %v251 = vunpack.c.l.b16 %v224
        %v252 = vunpack.c.l.b16 %v225
        %v253 = vunpack.c.l.b16 %v226
        %v254 = vpack.c.b16 %v247, %v246
        %v255 = vpack.c.b16 %v249, %v248
        %v256 = vpack.c.b16 %v251, %v250
        %v257 = vpack.c.b16 %v253, %v252
        %v262 = vunpack.c.l.b16 %v227
        %v263 = vunpack.c.l.b16 %v228
        %v264 = vunpack.c.l.b16 %v229
        %v265 = vunpack.c.l.b16 %v230
        %v266 = vpack.c.b16 %v263, %v262
        %v267 = vpack.c.b16 %v265, %v264
        %vm270 = vcmask 261120
        %v272 = vsel %vm270, %v254, 0
        %v275 = vsel %vm270, %v255, 0
        %v278 = vsel %vm270, %v256, 0
        %v281 = vsel %vm270, %v257, 0
        %283 = vmatprep.subr.bf16.mxu0 0
        %284 = vmatpush1.bf16.msra.mxu0 %v266
        %285 = vmatprep.subr.bf16.mxu0 0
        %286 = vmatpush1.bf16.msra.mxu0 %v267
        %287 = vmatprep.subr.bf16.mxu0 0
        %288 = vmatpush1.bf16.msra.mxu0 0
        %289 = vmatprep.subr.bf16.mxu0 0
        %290 = vmatpush1.bf16.msra.mxu0 0
        %291 = vmatprep.subr.bf16.mxu0 0
        %292 = vmatpush1.bf16.msra.mxu0 0
        %293 = vmatprep.subr.bf16.mxu0 0
        %294 = vmatpush1.bf16.msra.mxu0 0
        %295 = vmatprep.subr.bf16.mxu0 0
        %296 = vmatpush1.bf16.msra.mxu0 0
        %297 = vmatprep.subr.bf16.mxu0 0
        %298 = vmatpush1.bf16.msra.mxu0 0
        %299 = vmatprep.subr.bf16.mxu0 0
        %300 = vmatpush1.bf16.msra.mxu0 0
        %301 = vmatprep.subr.bf16.mxu0 0
        %302 = vmatpush1.bf16.msra.mxu0 0
        %303 = vmatprep.subr.bf16.mxu0 0
        %304 = vmatpush1.bf16.msra.mxu0 0
        %305 = vmatprep.subr.bf16.mxu0 0
        %306 = vmatpush1.bf16.msra.mxu0 0
        %307 = vmatprep.subr.bf16.mxu0 0
        %308 = vmatpush1.bf16.msra.mxu0 0
        %309 = vmatprep.subr.bf16.mxu0 0
        %310 = vmatpush1.bf16.msra.mxu0 0
        %311 = vmatprep.subr.bf16.mxu0 0
        %312 = vmatpush1.bf16.msra.mxu0 0
        %313 = vmatprep.subr.bf16.mxu0 0
        %314 = vmatpush1.bf16.msra.mxu0 0
        %315 = vmatprep.mubr.bf16.mxu0 0
        %316 = vmatmul.mubr.bf16.gmra.mrb[0].mxu0 %v272
        %v317 = vpop.f32.mrb[0].mxu0
        %v318 = vadd.f32 %v236, %v317
        %v319 = vpop.f32.mrb[0].mxu0
        %v320 = vpop.f32.mrb[0].mxu0
        %v321 = vadd.f32 %v236, %v320
        %v322 = vpop.f32.mrb[0].mxu0
        %323 = vmatprep.mubr.bf16.mxu0 0
        %324 = vmatmul.mubr.bf16.gmra.mrb[0].mxu0 %v275
        %v325 = vpop.f32.mrb[0].mxu0
        %v326 = vadd.f32 %v236, %v325
        %v327 = vpop.f32.mrb[0].mxu0
        %v328 = vpop.f32.mrb[0].mxu0
        %v329 = vadd.f32 %v236, %v328
        %v330 = vpop.f32.mrb[0].mxu0
        %331 = vmatprep.mubr.bf16.mxu0 0
        %332 = vmatmul.mubr.bf16.gmra.mrb[0].mxu0 %v278
        %v333 = vpop.f32.mrb[0].mxu0
        %v334 = vadd.f32 %v236, %v333
        %v335 = vpop.f32.mrb[0].mxu0
        %v336 = vpop.f32.mrb[0].mxu0
        %v337 = vadd.f32 %v236, %v336
        %v338 = vpop.f32.mrb[0].mxu0
        %339 = vmatprep.mubr.bf16.mxu0 0
        %340 = vmatmul.mubr.bf16.gmra.mrb[0].mxu0 %v281
        %v341 = vpop.f32.mrb[0].mxu0
        %v342 = vadd.f32 %v236, %v341
        %v343 = vpop.f32.mrb[0].mxu0
        %v344 = vpop.f32.mrb[0].mxu0
        %v345 = vadd.f32 %v236, %v344
        %v346 = vpop.f32.mrb[0].mxu0
        %347 = vdwg.mxu0
        %v348 = vxor.u32 %v318, 2147483648
        %v349 = vxor.u32 %v321, 2147483648
        %v350 = vxor.u32 %v326, 2147483648
        %v351 = vxor.u32 %v329, 2147483648
        %v352 = vxor.u32 %v334, 2147483648
        %v353 = vxor.u32 %v337, 2147483648
        %v354 = vxor.u32 %v342, 2147483648
        %v355 = vxor.u32 %v345, 2147483648
        %v356 = vmul.f32 %v348, 1.442695
        %v357 = vpow.pop %v356
        %v358 = vmul.f32 %v349, 1.442695
        %v359 = vpow.pop %v358
        %v360 = vmul.f32 %v350, 1.442695
        %v361 = vpow.pop %v360
        %v362 = vmul.f32 %v351, 1.442695
        %v363 = vpow.pop %v362
        %v364 = vmul.f32 %v352, 1.442695
        %v365 = vpow.pop %v364
        %v366 = vmul.f32 %v353, 1.442695
        %v367 = vpow.pop %v366
        %v368 = vmul.f32 %v354, 1.442695
        %v369 = vpow.pop %v368
        %v370 = vmul.f32 %v355, 1.442695
        %v371 = vpow.pop %v370
        %v372 = vadd.f32 %v357, 1.0
        %v373 = vadd.f32 %v359, 1.0
        %v374 = vadd.f32 %v361, 1.0
        %v375 = vadd.f32 %v363, 1.0
        %v376 = vadd.f32 %v365, 1.0
        %v377 = vadd.f32 %v367, 1.0
        %v378 = vadd.f32 %v369, 1.0
        %v379 = vadd.f32 %v371, 1.0
        %v380 = vrcp.pop %v372
        %v381 = vmul.f32 1.0, %v380
        %v382 = vrcp.pop %v373
        %v383 = vmul.f32 1.0, %v382
        %v384 = vrcp.pop %v374
        %v385 = vmul.f32 1.0, %v384
        %v386 = vrcp.pop %v375
        %v387 = vmul.f32 1.0, %v386
        %v388 = vrcp.pop %v376
        %v389 = vmul.f32 1.0, %v388
        %v390 = vrcp.pop %v377
        %v391 = vmul.f32 1.0, %v390
        %v392 = vrcp.pop %v378
        %v393 = vmul.f32 1.0, %v392
        %v394 = vrcp.pop %v379
        %v395 = vmul.f32 1.0, %v394
        %v396 = vmul.f32 %v318, %v381
        %v397 = vmul.f32 %v321, %v383
        %v398 = vmul.f32 %v326, %v385
        %v399 = vmul.f32 %v329, %v387
        %v400 = vmul.f32 %v334, %v389
        %v401 = vmul.f32 %v337, %v391
        %v402 = vmul.f32 %v342, %v393
        %v403 = vmul.f32 %v345, %v395
        %v404 = vpack.c.bf16 %v397, %v396
        %v405 = vpack.c.bf16 %v399, %v398
        %v406 = vpack.c.bf16 %v401, %v400
        %v407 = vpack.c.bf16 %v403, %v402
        %v412 = vunpack.c.l.b16 %v404
        %v413 = vunpack.c.h.b16 %v404
        %v414 = vunpack.c.l.b16 %v405
        %v415 = vunpack.c.h.b16 %v405
        %v416 = vunpack.c.l.b16 %v406
        %v417 = vunpack.c.h.b16 %v406
        %v418 = vunpack.c.l.b16 %v407
        %v419 = vunpack.c.h.b16 %v407
        %v420 = vpack.c.b16 %v412, %v412
        %v421 = vpack.c.b16 %v413, %v413
        %v422 = vpack.c.b16 %v414, %v414
        %v423 = vpack.c.b16 %v415, %v415
        %v424 = vpack.c.b16 %v416, %v416
        %v425 = vpack.c.b16 %v417, %v417
        %v426 = vpack.c.b16 %v418, %v418
        %v427 = vpack.c.b16 %v419, %v419
        %vm436 = vcmask 125952
        %437 = vst.msk [vmem:[%s215] sm:$0xf] %vm436, %v420
        %438 = vst.msk [vmem:[%s215 + $0x4] sm:$0xf] %vm436, %v421
        %439 = vst.msk [vmem:[%s215 + $0x8] sm:$0xf] %vm436, %v422
        %440 = vst.msk [vmem:[%s215 + $0xc] sm:$0xf] %vm436, %v423
        %441 = vst.msk [vmem:[%s215 + $0x10] sm:$0xf] %vm436, %v424
        %442 = vst.msk [vmem:[%s215 + $0x14] sm:$0xf] %vm436, %v425
        %443 = vst.msk [vmem:[%s215 + $0x18] sm:$0xf] %vm436, %v426
        %444 = vst.msk [vmem:[%s215 + $0x1c] sm:$0xf] %vm436, %v427
        %s445 = sand.u32 %s97, 1
        %s446 = scalar_lea.sflag [#allocation4], %s445
        %s447 = sand.u32 %s97, 1
        %s448 = smul.addr %s447, 32
        %s449 = scalar_lea.vmem [#allocation8], %s448
        // Predicated region
        $region45: #{a_call__.2} parent=31 // pred_check
          %p450 = pneg %p107
        $region46: #{a_call__.2} parent=31 // pred_check_branch
          %452 = sbr.rel (%p450) target = $region48
        $region47: #{a_call__.2} parent=31 // pred_region
          %s453 = smul.u32 8, %s21
          %s455 = ssub.s32 512, 512
          %456 = vsyncadd %s446, %s455
          %s457 = smul.addr %s453, 64
          %s458 = scalar_lea.hbm %s3, %s457
          %s459 = sshll.u32 %s449, 4
          %s460 = int_to_ptr.vmem [resolvable:$true] %s459
          %465 = dma.vmem_to_hbm [thread:$0]  %s460, 512, %s458, %s446, 64, 64, 4
        $region48: #{a_call__.2} parent=31 // pred_fallthru
          _
      $region32: #{a_call__.2} parent=5 // pred_fallthru
        _
      %p466 = scmp.le.s32.totalorder 2, %s16
      // Predicated region
      $region49: #{a_call__.2} parent=5 // pred_check
        %p467 = pneg %p466
      $region50: #{a_call__.2} parent=5 // pred_check_branch
        %469 = sbr.rel (%p467) target = $region52
      $region51: #{a_call__.2} parent=5 // pred_region
        %s470 = ssub.s32 %s16, 2
        // Predicated region
        $region53: #{a_call__.2} parent=51 // pred_check
          %p471 = pneg %p113
        $region54: #{a_call__.2} parent=51 // pred_check_branch
          %473 = sbr.rel (%p471) target = $region56
        $region55: #{a_call__.2} parent=51 // pred_region
          %s474 = sand.u32 %s98, 1
          %s475 = scalar_lea.sflag [#allocation4], %s474
          %s476 = sand.u32 %s98, 1
          %s477 = smul.addr %s476, 32
          %s478 = scalar_lea.vmem [#allocation8], %s477
          %479 = dma.done %s475, 512
        $region56: #{a_call__.2} parent=51 // pred_fallthru
          _
      $region52: #{a_call__.2} parent=5 // pred_fallthru
        _
    $region6: #{a_call__.2} parent=1 // loop_footer
      %s20 = sadd.s32 1, %s16
    $region7: #{a_call__.2} parent=1 // loop_footer_branch
      %15 = sbr.rel target = $region3
    $region8: #{a_call__.2} parent=1 // loop_exit
      _
    %480 = vsyncpa [#allocation3], 1
    %s481 = scalar_lea.sflag [#allocation3], 1
    %482 = vsyncpa %s481, 1
    %483 = vsyncpa [#allocation6], 1
    %484 = vsyncpa [#allocation4], 1
    %s485 = scalar_lea.sflag [#allocation4], 1
    %486 = vsyncpa %s485, 1

// kernel: a_call__.3
$region0: #{a_call__.3}
  #allocation0 [shape = 'u32[]', space=smem, size = 0x4, offset = 0x4, fixed_abs, tag = 'smem constant byte address 0x4 - core index']
  #allocation1 [shape = 'u32[144,128]{1,0:T(1,128)}', space=vmem, size = 0x12000, scoped, tag = 'internal scratch']
  %s0 = inlined_call_operand.hbm [shape: bf16[32,160], index: 0, kind: input, shape index: {}]
  %s1 = inlined_call_operand.hbm [shape: bf16[160,128], index: 1, kind: input, shape index: {}]
  %s2 = inlined_call_operand.hbm [shape: f32[1,128], index: 2, kind: input, shape index: {}]
  %s3 = inlined_call_operand.hbm [shape: bf16[128,128], index: 3, kind: input, shape index: {}]
  %s4 = inlined_call_operand.hbm [shape: f32[1,128], index: 4, kind: input, shape index: {}]
  %s5 = inlined_call_operand.hbm [shape: f32[32,2], index: 5, kind: input, shape index: {}]
  %s6 = inlined_call_operand.hbm [shape: f32[4,128], index: 6, kind: input, shape index: {}]
  %s7 = inlined_call_operand.hbm [shape: f32[32,27], index: 7, kind: output, shape index: {}]
  %s8 = sld [smem:[#allocation0]]
  $region89: #{a_call__.3} parent=0
    _
  %s10 = ssub.s32 1, %s8
  %s11 = scalar_select 0, %s10, %s8
  $region1: #{a_call__.3} parent=0
    #allocation2 [shape = 'u8[16384]{0}', space=vmem, size = 0x4000, scoped, tag = 'input window, operand 0']
    #allocation3 [shape = 's32[2]{0}', space=sflag, size = 0x8, scoped, tag = 'scoped memory for a_call__.3']
    #allocation4 [shape = 's32[2]{0}', space=sflag, size = 0x8, scoped, tag = 'scoped memory for a_call__.3']
    #allocation5 [shape = 'u8[40960]{0}', space=vmem, size = 0xa000, scoped, tag = 'input window, operand 1, single buffered']
    #allocation6 [shape = 's32[1]{0}', space=sflag, size = 0x4, scoped, tag = 'scoped memory for a_call__.3']
    #allocation7 [shape = 'u8[512]{0}', space=vmem, size = 0x400, scoped, tag = 'input window, operand 2, single buffered']
    #allocation8 [shape = 'u8[32768]{0}', space=vmem, size = 0x8000, scoped, tag = 'input window, operand 3, single buffered']
    #allocation9 [shape = 's32[1]{0}', space=sflag, size = 0x4, scoped, tag = 'scoped memory for a_call__.3']
    #allocation10 [shape = 'u8[512]{0}', space=vmem, size = 0x400, scoped, tag = 'input window, operand 4, single buffered']
    #allocation11 [shape = 'u8[16384]{0}', space=vmem, size = 0x4000, scoped, tag = 'input window, operand 5']
    #allocation12 [shape = 's32[2]{0}', space=sflag, size = 0x8, scoped, tag = 'scoped memory for a_call__.3']
    #allocation13 [shape = 'u8[2048]{0}', space=vmem, size = 0x800, scoped, tag = 'input window, operand 6, single buffered']
    #allocation14 [shape = 'u8[16384]{0}', space=vmem, size = 0x4000, scoped, tag = 'output window, operand 0']
    %12 = vsyncpa [#allocation3], 0
    %s13 = scalar_lea.sflag [#allocation3], 1
    %14 = vsyncpa %s13, 0
    %15 = vsyncpa [#allocation6], 0
    %16 = vsyncpa [#allocation9], 0
    %17 = vsyncpa [#allocation12], 0
    %s18 = scalar_lea.sflag [#allocation12], 1
    %19 = vsyncpa %s18, 0
    %20 = vsyncpa [#allocation4], 0
    %s21 = scalar_lea.sflag [#allocation4], 1
    %22 = vsyncpa %s21, 0
    loop: start=0, step=1, limit=4
    $region2: #{a_call__.3} parent=1 // loop_pre_header
      _
    $region3: #{a_call__.3} parent=1 // loop_header
      %s24 = sphi 0, %s28
      %p25 = scmp.ge.s32.totalorder %s24, 4
      %s34 = sphi 0, %s36
      %s37 = sphi 0, %s34
      %s38 = sphi 0, %s37
      %s54 = sphi 0, %s38
      %s58 = sphi 0, %s58
      %s60 = sphi 0, %s58
      %s61 = sphi 0, %s60
      %s75 = sphi 0, %s61
      %s79 = sphi 0, %s79
      %s81 = sphi 0, %s79
      %s82 = sphi 0, %s81
      %s96 = sphi 0, %s82
      %s100 = sphi 0, %s100
      %s102 = sphi 0, %s100
      %s103 = sphi 0, %s102
      %s117 = sphi 0, %s103
      %s121 = sphi 0, %s121
      %s123 = sphi 0, %s121
      %s124 = sphi 0, %s123
      %s138 = sphi 0, %s124
      %s144 = sphi 0, %s146
      %s147 = sphi 0, %s144
      %s148 = sphi 0, %s147
      %s164 = sphi 0, %s148
      %s168 = sphi 0, %s168
      %s170 = sphi 0, %s168
      %s171 = sphi 0, %s170
      %s185 = sphi 0, %s171
      %s191 = sphi 0, %s193
      %s194 = sphi 0, %s191
      %s195 = sphi 0, %s194
      %s211 = sphi 0, %s195
    $region4: #{a_call__.3} parent=1 // loop_header_branch
      %27 = sbr.rel (%p25) target = $region8
    $region5: #{a_call__.3} parent=1 // loop_body
      %s29 = ssub.s32 %s24, 1
      %s30 = ssub.s32 %s24, 2
      %s31 = sadd.s32 %s24, 1
      %s32 = ssub.s32 %s24, %s31
      %p33 = scmp.eq.s32.totalorder %s32, 0
      %s35 = sadd.s32 %s34, 1
      %s36 = scalar_select %p33, %s34, %s35
      %p39 = pneg %p33
      %p40 = scmp.eq.s32.totalorder %s24, 1
      %p41 = por %p39, %p40
      %p42 = scmp.ne.s32.totalorder %s34, %s37
      %p43 = scmp.eq.s32.totalorder %s24, 0
      %p44 = por %p42, %p43
      %p45 = scmp.ne.s32.totalorder %s34, %s37
      %p46 = scmp.eq.s32.totalorder %s29, 1
      %p47 = por %p45, %p46
      %p48 = scmp.ne.s32.totalorder %s37, %s38
      %p49 = scmp.eq.s32.totalorder %s29, 0
      %p50 = por %p48, %p49
      %p51 = scmp.ne.s32.totalorder %s37, %s38
      %p52 = scmp.eq.s32.totalorder %s30, 1
      %p53 = por %p51, %p52
      %p55 = scmp.ne.s32.totalorder %s38, %s54
      %p56 = scmp.eq.s32.totalorder %s30, 0
      %p57 = por %p55, %p56
      %s59 = sadd.s32 %s58, 1
      %p62 = scmp.eq.s32.totalorder %s24, 1
      %p63 = scmp.ne.s32.totalorder %s58, %s60
      %p64 = scmp.eq.s32.totalorder %s24, 0
      %p65 = por %p63, %p64
      %p66 = scmp.ne.s32.totalorder %s58, %s60
      %p67 = scmp.eq.s32.totalorder %s29, 1
      %p68 = por %p66, %p67
      %p69 = scmp.ne.s32.totalorder %s60, %s61
      %p70 = scmp.eq.s32.totalorder %s29, 0
      %p71 = por %p69, %p70
      %p72 = scmp.ne.s32.totalorder %s60, %s61
      %p73 = scmp.eq.s32.totalorder %s30, 1
      %p74 = por %p72, %p73
      %p76 = scmp.ne.s32.totalorder %s61, %s75
      %p77 = scmp.eq.s32.totalorder %s30, 0
      %p78 = por %p76, %p77
      %s80 = sadd.s32 %s79, 1
      %p83 = scmp.eq.s32.totalorder %s24, 1
      %p84 = scmp.ne.s32.totalorder %s79, %s81
      %p85 = scmp.eq.s32.totalorder %s24, 0
      %p86 = por %p84, %p85
      %p87 = scmp.ne.s32.totalorder %s79, %s81
      %p88 = scmp.eq.s32.totalorder %s29, 1
      %p89 = por %p87, %p88
      %p90 = scmp.ne.s32.totalorder %s81, %s82
      %p91 = scmp.eq.s32.totalorder %s29, 0
      %p92 = por %p90, %p91
      %p93 = scmp.ne.s32.totalorder %s81, %s82
      %p94 = scmp.eq.s32.totalorder %s30, 1
      %p95 = por %p93, %p94
      %p97 = scmp.ne.s32.totalorder %s82, %s96
      %p98 = scmp.eq.s32.totalorder %s30, 0
      %p99 = por %p97, %p98
      %s101 = sadd.s32 %s100, 1
      %p104 = scmp.eq.s32.totalorder %s24, 1
      %p105 = scmp.ne.s32.totalorder %s100, %s102
      %p106 = scmp.eq.s32.totalorder %s24, 0
      %p107 = por %p105, %p106
      %p108 = scmp.ne.s32.totalorder %s100, %s102
      %p109 = scmp.eq.s32.totalorder %s29, 1
      %p110 = por %p108, %p109
      %p111 = scmp.ne.s32.totalorder %s102, %s103
      %p112 = scmp.eq.s32.totalorder %s29, 0
      %p113 = por %p111, %p112
      %p114 = scmp.ne.s32.totalorder %s102, %s103
      %p115 = scmp.eq.s32.totalorder %s30, 1
      %p116 = por %p114, %p115
      %p118 = scmp.ne.s32.totalorder %s103, %s117
      %p119 = scmp.eq.s32.totalorder %s30, 0
      %p120 = por %p118, %p119
      %s122 = sadd.s32 %s121, 1
      %p125 = scmp.eq.s32.totalorder %s24, 1
      %p126 = scmp.ne.s32.totalorder %s121, %s123
      %p127 = scmp.eq.s32.totalorder %s24, 0
      %p128 = por %p126, %p127
      %p129 = scmp.ne.s32.totalorder %s121, %s123
      %p130 = scmp.eq.s32.totalorder %s29, 1
      %p131 = por %p129, %p130
      %p132 = scmp.ne.s32.totalorder %s123, %s124
      %p133 = scmp.eq.s32.totalorder %s29, 0
      %p134 = por %p132, %p133
      %p135 = scmp.ne.s32.totalorder %s123, %s124
      %p136 = scmp.eq.s32.totalorder %s30, 1
      %p137 = por %p135, %p136
      %p139 = scmp.ne.s32.totalorder %s124, %s138
      %p140 = scmp.eq.s32.totalorder %s30, 0
      %p141 = por %p139, %p140
      %s142 = ssub.s32 %s24, %s31
      %p143 = scmp.eq.s32.totalorder %s142, 0
      %s145 = sadd.s32 %s144, 1
      %s146 = scalar_select %p143, %s144, %s145
      %p149 = pneg %p143
      %p150 = scmp.eq.s32.totalorder %s24, 1
      %p151 = por %p149, %p150
      %p152 = scmp.ne.s32.totalorder %s144, %s147
      %p153 = scmp.eq.s32.totalorder %s24, 0
      %p154 = por %p152, %p153
      %p155 = scmp.ne.s32.totalorder %s144, %s147
      %p156 = scmp.eq.s32.totalorder %s29, 1
      %p157 = por %p155, %p156
      %p158 = scmp.ne.s32.totalorder %s147, %s148
      %p159 = scmp.eq.s32.totalorder %s29, 0
      %p160 = por %p158, %p159
      %p161 = scmp.ne.s32.totalorder %s147, %s148
      %p162 = scmp.eq.s32.totalorder %s30, 1
      %p163 = por %p161, %p162
      %p165 = scmp.ne.s32.totalorder %s148, %s164
      %p166 = scmp.eq.s32.totalorder %s30, 0
      %p167 = por %p165, %p166
      %s169 = sadd.s32 %s168, 1
      %p172 = scmp.eq.s32.totalorder %s24, 1
      %p173 = scmp.ne.s32.totalorder %s168, %s170
      %p174 = scmp.eq.s32.totalorder %s24, 0
      %p175 = por %p173, %p174
      %p176 = scmp.ne.s32.totalorder %s168, %s170
      %p177 = scmp.eq.s32.totalorder %s29, 1
      %p178 = por %p176, %p177
      %p179 = scmp.ne.s32.totalorder %s170, %s171
      %p180 = scmp.eq.s32.totalorder %s29, 0
      %p181 = por %p179, %p180
      %p182 = scmp.ne.s32.totalorder %s170, %s171
      %p183 = scmp.eq.s32.totalorder %s30, 1
      %p184 = por %p182, %p183
      %p186 = scmp.ne.s32.totalorder %s171, %s185
      %p187 = scmp.eq.s32.totalorder %s30, 0
      %p188 = por %p186, %p187
      %s189 = ssub.s32 %s24, %s31
      %p190 = scmp.eq.s32.totalorder %s189, 0
      %s192 = sadd.s32 %s191, 1
      %s193 = scalar_select %p190, %s191, %s192
      %p196 = pneg %p190
      %p197 = scmp.eq.s32.totalorder %s24, 1
      %p198 = por %p196, %p197
      %p199 = scmp.ne.s32.totalorder %s191, %s194
      %p200 = scmp.eq.s32.totalorder %s24, 0
      %p201 = por %p199, %p200
      %p202 = scmp.ne.s32.totalorder %s191, %s194
      %p203 = scmp.eq.s32.totalorder %s29, 1
      %p204 = por %p202, %p203
      %p205 = scmp.ne.s32.totalorder %s194, %s195
      %p206 = scmp.eq.s32.totalorder %s29, 0
      %p207 = por %p205, %p206
      %p208 = scmp.ne.s32.totalorder %s194, %s195
      %p209 = scmp.eq.s32.totalorder %s30, 1
      %p210 = por %p208, %p209
      %p212 = scmp.ne.s32.totalorder %s195, %s211
      %p213 = scmp.eq.s32.totalorder %s30, 0
      %p214 = por %p212, %p213
      %p215 = scmp.le.s32.totalorder 1, %s24
      %p216 = scmp.lt.s32.totalorder %s24, 3
      %p217 = pnand %p215, %p216
      %p218 = pneg %p217
      // Predicated region
      $region9: #{a_call__.3} parent=5 // pred_check
        _
      $region10: #{a_call__.3} parent=5 // pred_check_branch
        %220 = sbr.rel (%p217) target = $region12
      $region11: #{a_call__.3} parent=5 // pred_region
        %s221 = ssub.s32 %s24, 1
        // Predicated region
        $region13: #{a_call__.3} parent=11 // pred_check
          %p222 = pneg %p71
        $region14: #{a_call__.3} parent=11 // pred_check_branch
          %224 = sbr.rel (%p222) target = $region16
        $region15: #{a_call__.3} parent=11 // pred_region
          %s226 = ssub.s32 1280, 1280
          %227 = vsyncadd [#allocation6], %s226
          %s228 = sshll.u32 [#allocation5], 4
          %s229 = int_to_ptr.vmem [resolvable:$true] %s228
          %234 = dma.hbm_to_vmem [thread:$0]  %s1, 1280, %s229, [#allocation6], 64, 64, 4
        $region16: #{a_call__.3} parent=11 // pred_fallthru
          _
        // Predicated region
        $region17: #{a_call__.3} parent=11 // pred_check
          %p235 = pneg %p92
        $region18: #{a_call__.3} parent=11 // pred_check_branch
          %237 = sbr.rel (%p235) target = $region20
        $region19: #{a_call__.3} parent=11 // pred_region
          %s239 = ssub.s32 16, 16
          %240 = vsyncadd [#allocation6], %s239
          %s242 = sshll.u32 [#allocation7], 4
          %s243 = int_to_ptr.vmem [resolvable:$true] %s242
          %245 = dma.hbm_to_vmem [thread:$0]  %s2, 16, %s243, [#allocation6]
        $region20: #{a_call__.3} parent=11 // pred_fallthru
          _
        // Predicated region
        $region21: #{a_call__.3} parent=11 // pred_check
          %p246 = pneg %p113
        $region22: #{a_call__.3} parent=11 // pred_check_branch
          %248 = sbr.rel (%p246) target = $region24
        $region23: #{a_call__.3} parent=11 // pred_region
          %s250 = ssub.s32 1024, 1024
          %251 = vsyncadd [#allocation9], %s250
          %s252 = sshll.u32 [#allocation8], 4
          %s253 = int_to_ptr.vmem [resolvable:$true] %s252
          %258 = dma.hbm_to_vmem [thread:$0]  %s3, 1024, %s253, [#allocation9], 64, 64, 4
        $region24: #{a_call__.3} parent=11 // pred_fallthru
          _
        // Predicated region
        $region25: #{a_call__.3} parent=11 // pred_check
          %p259 = pneg %p134
        $region26: #{a_call__.3} parent=11 // pred_check_branch
          %261 = sbr.rel (%p259) target = $region28
        $region27: #{a_call__.3} parent=11 // pred_region
          %s263 = ssub.s32 16, 16
          %264 = vsyncadd [#allocation9], %s263
          %s266 = sshll.u32 [#allocation10], 4
          %s267 = int_to_ptr.vmem [resolvable:$true] %s266
          %269 = dma.hbm_to_vmem [thread:$0]  %s4, 16, %s267, [#allocation9]
        $region28: #{a_call__.3} parent=11 // pred_fallthru
          _
        // Predicated region
        $region29: #{a_call__.3} parent=11 // pred_check
          %p270 = pneg %p181
        $region30: #{a_call__.3} parent=11 // pred_check_branch
          %272 = sbr.rel (%p270) target = $region32
        $region31: #{a_call__.3} parent=11 // pred_region
          %s274 = ssub.s32 64, 64
          %275 = vsyncadd [#allocation12], %s274
          %s277 = sshll.u32 [#allocation13], 4
          %s278 = int_to_ptr.vmem [resolvable:$true] %s277
          %280 = dma.hbm_to_vmem [thread:$0]  %s6, 64, %s278, [#allocation12]
        $region32: #{a_call__.3} parent=11 // pred_fallthru
          _
      $region12: #{a_call__.3} parent=5 // pred_fallthru
        _
      %p281 = scmp.lt.s32.totalorder %s24, 2
      // Predicated region
      $region33: #{a_call__.3} parent=5 // pred_check
        %p282 = pneg %p281
      $region34: #{a_call__.3} parent=5 // pred_check_branch
        %284 = sbr.rel (%p282) target = $region36
      $region35: #{a_call__.3} parent=5 // pred_region
        // Predicated region
        $region37: #{a_call__.3} parent=35 // pred_check
          %p285 = pneg %p44
        $region38: #{a_call__.3} parent=35 // pred_check_branch
          %287 = sbr.rel (%p285) target = $region40
        $region39: #{a_call__.3} parent=35 // pred_region
          %s288 = sand.u32 %s34, 1
          %s289 = scalar_lea.sflag [#allocation3], %s288
          %s290 = sand.u32 %s34, 1
          %s291 = smul.addr %s290, 16
          %s292 = scalar_lea.vmem [#allocation2], %s291
          %s293 = smul.u32 2, %s24
          %s295 = ssub.s32 256, 256
          %296 = vsyncadd %s289, %s295
          %s297 = smul.addr %s293, 2
          %s298 = smul.addr %s297, 64
          %s299 = scalar_lea.hbm %s0, %s298
          %s300 = sshll.u32 %s292, 4
          %s301 = int_to_ptr.vmem [resolvable:$true] %s300
          %306 = dma.hbm_to_vmem [thread:$0]  %s299, 256, %s301, %s289, 128, 128, 8
        $region40: #{a_call__.3} parent=35 // pred_fallthru
          _
        // Predicated region
        $region41: #{a_call__.3} parent=35 // pred_check
          %p307 = pneg %p154
        $region42: #{a_call__.3} parent=35 // pred_check_branch
          %309 = sbr.rel (%p307) target = $region44
        $region43: #{a_call__.3} parent=35 // pred_region
          %s310 = sand.u32 %s24, 1
          %s311 = scalar_lea.sflag [#allocation12], %s310
          %s312 = sand.u32 %s144, 1
          %s313 = smul.addr %s312, 16
          %s314 = scalar_lea.vmem [#allocation11], %s313
          %s315 = smul.u32 2, %s24
          %s317 = ssub.s32 256, 256
          %318 = vsyncadd %s311, %s317
          %s319 = smul.addr %s315, 128
          %s320 = scalar_lea.hbm %s5, %s319
          %s321 = sshll.u32 %s314, 4
          %s322 = int_to_ptr.vmem [resolvable:$true] %s321
          %327 = dma.hbm_to_vmem [thread:$0]  %s320, 256, %s322, %s311, 128, 128, 8
        $region44: #{a_call__.3} parent=35 // pred_fallthru
          _
      $region36: #{a_call__.3} parent=5 // pred_fallthru
        _
      %p328 = scmp.le.s32.totalorder 1, %s24
      %p329 = scmp.lt.s32.totalorder %s24, 3
      %p330 = pnand %p328, %p329
      %p331 = pneg %p330
      // Predicated region
      $region45: #{a_call__.3} parent=5 // pred_check
        _
      $region46: #{a_call__.3} parent=5 // pred_check_branch
        %333 = sbr.rel (%p330) target = $region48
      $region47: #{a_call__.3} parent=5 // pred_region
        %s334 = ssub.s32 %s24, 1
        %s335 = sand.u32 %s37, 1
        %s336 = scalar_lea.sflag [#allocation3], %s335
        %s337 = sand.u32 %s37, 1
        %s338 = smul.addr %s337, 16
        %s339 = scalar_lea.vmem [#allocation2], %s338
        // Predicated region
        $region49: #{a_call__.3} parent=47 // pred_check
          %p340 = pneg %p50
        $region50: #{a_call__.3} parent=47 // pred_check_branch
          %342 = sbr.rel (%p340) target = $region52
        $region51: #{a_call__.3} parent=47 // pred_region
          %343 = dma.done %s336, 256
        $region52: #{a_call__.3} parent=47 // pred_fallthru
          _
        // Predicated region
        $region53: #{a_call__.3} parent=47 // pred_check
          %p344 = pneg %p71
        $region54: #{a_call__.3} parent=47 // pred_check_branch
          %346 = sbr.rel (%p344) target = $region56
        $region55: #{a_call__.3} parent=47 // pred_region
          %347 = dma.done [#allocation6], 1280
        $region56: #{a_call__.3} parent=47 // pred_fallthru
          _
        // Predicated region
        $region57: #{a_call__.3} parent=47 // pred_check
          %p348 = pneg %p92
        $region58: #{a_call__.3} parent=47 // pred_check_branch
          %350 = sbr.rel (%p348) target = $region60
        $region59: #{a_call__.3} parent=47 // pred_region
          %351 = dma.done [#allocation6], 16
        $region60: #{a_call__.3} parent=47 // pred_fallthru
          _
        // Predicated region
        $region61: #{a_call__.3} parent=47 // pred_check
          %p352 = pneg %p113
        $region62: #{a_call__.3} parent=47 // pred_check_branch
          %354 = sbr.rel (%p352) target = $region64
        $region63: #{a_call__.3} parent=47 // pred_region
          %355 = dma.done [#allocation9], 1024
        $region64: #{a_call__.3} parent=47 // pred_fallthru
          _
        // Predicated region
        $region65: #{a_call__.3} parent=47 // pred_check
          %p356 = pneg %p134
        $region66: #{a_call__.3} parent=47 // pred_check_branch
          %358 = sbr.rel (%p356) target = $region68
        $region67: #{a_call__.3} parent=47 // pred_region
          %359 = dma.done [#allocation9], 16
        $region68: #{a_call__.3} parent=47 // pred_fallthru
          _
        %s360 = sand.u32 %s29, 1
        %s361 = scalar_lea.sflag [#allocation12], %s360
        %s362 = sand.u32 %s147, 1
        %s363 = smul.addr %s362, 16
        %s364 = scalar_lea.vmem [#allocation11], %s363
        // Predicated region
        $region69: #{a_call__.3} parent=47 // pred_check
          %p365 = pneg %p160
        $region70: #{a_call__.3} parent=47 // pred_check_branch
          %367 = sbr.rel (%p365) target = $region72
        $region71: #{a_call__.3} parent=47 // pred_region
          %368 = dma.done %s361, 256
        $region72: #{a_call__.3} parent=47 // pred_fallthru
          _
        // Predicated region
        $region73: #{a_call__.3} parent=47 // pred_check
          %p369 = pneg %p181
        $region74: #{a_call__.3} parent=47 // pred_check_branch
          %371 = sbr.rel (%p369) target = $region76
        $region75: #{a_call__.3} parent=47 // pred_region
          %372 = dma.done [#allocation12], 64
        $region76: #{a_call__.3} parent=47 // pred_fallthru
          _
        %s373 = sand.u32 %s37, 1
        %s374 = scalar_lea.sflag [#allocation3], %s373
        %s375 = sand.u32 %s37, 1
        %s376 = smul.addr %s375, 16
        %s377 = scalar_lea.vmem [#allocation2], %s376
        %p378 = pneg %p50
        %p379 = pneg %p47
        %p380 = pneg %p71
        %p381 = pneg %p68
        %p382 = pneg %p92
        %p383 = pneg %p89
        %p384 = pneg %p113
        %p385 = pneg %p110
        %p386 = pneg %p134
        %p387 = pneg %p131
        %s388 = sand.u32 %s29, 1
        %s389 = scalar_lea.sflag [#allocation12], %s388
        %s390 = sand.u32 %s147, 1
        %s391 = smul.addr %s390, 16
        %s392 = scalar_lea.vmem [#allocation11], %s391
        %p393 = pneg %p160
        %p394 = pneg %p157
        %p395 = pneg %p181
        %p396 = pneg %p178
        %p397 = pneg %p207
        %p398 = pneg %p204
        %s399 = sand.u32 %s194, 1
        %s400 = scalar_lea.sflag [#allocation4], %s399
        %s401 = sand.u32 %s194, 1
        %s402 = smul.addr %s401, 16
        %s403 = scalar_lea.vmem [#allocation14], %s402
        %s404 = smul.u32 2, %s29
        %s405 = smul.u32 2, %s29
        %s406 = smul.u32 2, %s29
        %v408 = vld [vmem:[%s339] sm:$0xff]
        %v409 = vld [vmem:[%s339 + $0x8] sm:$0xff]
        %v410 = vld [vmem:[#allocation5] sm:$0xf]
        %v411 = vld [vmem:[#allocation5 + $0x4] sm:$0xf]
        %v412 = vld [vmem:[#allocation5 + $0x8] sm:$0xf]
        %v413 = vld [vmem:[#allocation5 + $0xc] sm:$0xf]
        %v414 = vld [vmem:[#allocation5 + $0x10] sm:$0xf]
        %v415 = vld [vmem:[#allocation5 + $0x14] sm:$0xf]
        %v416 = vld [vmem:[#allocation5 + $0x18] sm:$0xf]
        %v417 = vld [vmem:[#allocation5 + $0x1c] sm:$0xf]
        %v418 = vld [vmem:[#allocation5 + $0x20] sm:$0xf]
        %v419 = vld [vmem:[#allocation5 + $0x24] sm:$0xf]
        %v420 = vld [vmem:[#allocation5 + $0x28] sm:$0xf]
        %v421 = vld [vmem:[#allocation5 + $0x2c] sm:$0xf]
        %v422 = vld [vmem:[#allocation5 + $0x30] sm:$0xf]
        %v423 = vld [vmem:[#allocation5 + $0x34] sm:$0xf]
        %v424 = vld [vmem:[#allocation5 + $0x38] sm:$0xf]
        %v425 = vld [vmem:[#allocation5 + $0x3c] sm:$0xf]
        %v426 = vld [vmem:[#allocation5 + $0x40] sm:$0xf]
        %v427 = vld [vmem:[#allocation5 + $0x44] sm:$0xf]
        %v428 = vld [vmem:[#allocation5 + $0x48] sm:$0xf]
        %v429 = vld [vmem:[#allocation5 + $0x4c] sm:$0xf]
        %v430 = vld [vmem:[#allocation7] sm:$0x1]
        %v432 = vlaneseq
        %v433 = vshrl.u32 %v432, 7
        %v434 = vsub.s32 0, %v433
        %v435 = vrot.slane %v430, %v434
        %v439 = vunpack.c.l.b16 %v408
        %v440 = vunpack.c.h.b16 %v408
        %v441 = vunpack.c.l.b16 %v409
        %v442 = vunpack.c.h.b16 %v409
        %v443 = vpack.c.b16 %v441, %v439
        %v444 = vpack.c.b16 %v442, %v440
        %v466 = vunpack.c.l.b16 %v410
        %v467 = vunpack.c.l.b16 %v411
        %v468 = vunpack.c.l.b16 %v412
        %v469 = vunpack.c.l.b16 %v413
        %v470 = vunpack.c.l.b16 %v414
        %v471 = vunpack.c.l.b16 %v415
        %v472 = vunpack.c.l.b16 %v416
        %v473 = vunpack.c.l.b16 %v417
        %v474 = vunpack.c.l.b16 %v418
        %v475 = vunpack.c.l.b16 %v419
        %v476 = vunpack.c.l.b16 %v420
        %v477 = vunpack.c.l.b16 %v421
        %v478 = vunpack.c.l.b16 %v422
        %v479 = vunpack.c.l.b16 %v423
        %v480 = vunpack.c.l.b16 %v424
        %v481 = vunpack.c.l.b16 %v425
        %v482 = vunpack.c.l.b16 %v426
        %v483 = vunpack.c.l.b16 %v427
        %v484 = vunpack.c.l.b16 %v428
        %v485 = vunpack.c.l.b16 %v429
        %v486 = vpack.c.b16 %v467, %v466
        %v487 = vpack.c.b16 %v469, %v468
        %v488 = vpack.c.b16 %v471, %v470
        %v489 = vpack.c.b16 %v473, %v472
        %v490 = vpack.c.b16 %v475, %v474
        %v491 = vpack.c.b16 %v477, %v476
        %v492 = vpack.c.b16 %v479, %v478
        %v493 = vpack.c.b16 %v481, %v480
        %v494 = vpack.c.b16 %v483, %v482
        %v495 = vpack.c.b16 %v485, %v484
        %vm506 = vcmask 261120
        %v508 = vsel %vm506, %v444, 0
        %510 = vmatprep.subr.bf16.mxu0 0
        %511 = vmatpush1.bf16.msra.mxu0 %v486
        %512 = vmatprep.subr.bf16.mxu0 0
        %513 = vmatpush1.bf16.msra.mxu0 %v487
        %514 = vmatprep.subr.bf16.mxu0 0
        %515 = vmatpush1.bf16.msra.mxu0 %v488
        %516 = vmatprep.subr.bf16.mxu0 0
        %517 = vmatpush1.bf16.msra.mxu0 %v489
        %518 = vmatprep.subr.bf16.mxu0 0
        %519 = vmatpush1.bf16.msra.mxu0 %v490
        %520 = vmatprep.subr.bf16.mxu0 0
        %521 = vmatpush1.bf16.msra.mxu0 %v491
        %522 = vmatprep.subr.bf16.mxu0 0
        %523 = vmatpush1.bf16.msra.mxu0 %v492
        %524 = vmatprep.subr.bf16.mxu0 0
        %525 = vmatpush1.bf16.msra.mxu0 %v493
        %526 = vmatprep.subr.bf16.mxu0 0
        %527 = vmatpush1.bf16.msra.mxu0 %v494
        %528 = vmatprep.subr.bf16.mxu0 0
        %529 = vmatpush1.bf16.msra.mxu0 %v495
        %530 = vmatprep.subr.bf16.mxu0 0
        %531 = vmatpush1.bf16.msra.mxu0 0
        %532 = vmatprep.subr.bf16.mxu0 0
        %533 = vmatpush1.bf16.msra.mxu0 0
        %534 = vmatprep.subr.bf16.mxu0 0
        %535 = vmatpush1.bf16.msra.mxu0 0
        %536 = vmatprep.subr.bf16.mxu0 0
        %537 = vmatpush1.bf16.msra.mxu0 0
        %538 = vmatprep.subr.bf16.mxu0 0
        %539 = vmatpush1.bf16.msra.mxu0 0
        %540 = vmatprep.subr.bf16.mxu0 0
        %541 = vmatpush1.bf16.msra.mxu0 0
        %542 = vmatprep.mubr.bf16.mxu0 %v508
        %543 = vmatmul.mubr.bf16.gmra.mrb[0].mxu0 %v443
        %v544 = vpop.f32.mrb[0].mxu0
        %v545 = vadd.f32 %v435, %v544
        %v546 = vpop.f32.mrb[0].mxu0
        %v547 = vpop.f32.mrb[0].mxu0
        %v548 = vadd.f32 %v435, %v547
        %v549 = vpop.f32.mrb[0].mxu0
        %550 = vdwg.mxu0
        %v551 = vxor.u32 %v545, 2147483648
        %v552 = vxor.u32 %v548, 2147483648
        %v553 = vmul.f32 %v551, 1.442695
        %v554 = vpow.pop %v553
        %v555 = vmul.f32 %v552, 1.442695
        %v556 = vpow.pop %v555
        %v557 = vadd.f32 %v554, 1.0
        %v558 = vadd.f32 %v556, 1.0
        %v559 = vrcp.pop %v557
        %v560 = vmul.f32 1.0, %v559
        %v561 = vrcp.pop %v558
        %v562 = vmul.f32 1.0, %v561
        %v563 = vmul.f32 %v545, %v560
        %v564 = vmul.f32 %v548, %v562
        %v565 = vpack.c.bf16 %v564, %v563
        %v566 = vld [vmem:[#allocation8] sm:$0xf]
        %v567 = vld [vmem:[#allocation8 + $0x4] sm:$0xf]
        %v568 = vld [vmem:[#allocation8 + $0x8] sm:$0xf]
        %v569 = vld [vmem:[#allocation8 + $0xc] sm:$0xf]
        %v570 = vld [vmem:[#allocation8 + $0x10] sm:$0xf]
        %v571 = vld [vmem:[#allocation8 + $0x14] sm:$0xf]
        %v572 = vld [vmem:[#allocation8 + $0x18] sm:$0xf]
        %v573 = vld [vmem:[#allocation8 + $0x1c] sm:$0xf]
        %v574 = vld [vmem:[#allocation8 + $0x20] sm:$0xf]
        %v575 = vld [vmem:[#allocation8 + $0x24] sm:$0xf]
        %v576 = vld [vmem:[#allocation8 + $0x28] sm:$0xf]
        %v577 = vld [vmem:[#allocation8 + $0x2c] sm:$0xf]
        %v578 = vld [vmem:[#allocation8 + $0x30] sm:$0xf]
        %v579 = vld [vmem:[#allocation8 + $0x34] sm:$0xf]
        %v580 = vld [vmem:[#allocation8 + $0x38] sm:$0xf]
        %v581 = vld [vmem:[#allocation8 + $0x3c] sm:$0xf]
        %v582 = vld [vmem:[#allocation10] sm:$0x1]
        %v584 = vlaneseq
        %v585 = vshrl.u32 %v584, 7
        %v586 = vsub.s32 0, %v585
        %v587 = vrot.slane %v582, %v586
        %v605 = vunpack.c.l.b16 %v566
        %v606 = vunpack.c.l.b16 %v567
        %v607 = vunpack.c.l.b16 %v568
        %v608 = vunpack.c.l.b16 %v569
        %v609 = vunpack.c.l.b16 %v570
        %v610 = vunpack.c.l.b16 %v571
        %v611 = vunpack.c.l.b16 %v572
        %v612 = vunpack.c.l.b16 %v573
        %v613 = vunpack.c.l.b16 %v574
        %v614 = vunpack.c.l.b16 %v575
        %v615 = vunpack.c.l.b16 %v576
        %v616 = vunpack.c.l.b16 %v577
        %v617 = vunpack.c.l.b16 %v578
        %v618 = vunpack.c.l.b16 %v579
        %v619 = vunpack.c.l.b16 %v580
        %v620 = vunpack.c.l.b16 %v581
        %v621 = vpack.c.b16 %v606, %v605
        %v622 = vpack.c.b16 %v608, %v607
        %v623 = vpack.c.b16 %v610, %v609
        %v624 = vpack.c.b16 %v612, %v611
        %v625 = vpack.c.b16 %v614, %v613
        %v626 = vpack.c.b16 %v616, %v615
        %v627 = vpack.c.b16 %v618, %v617
        %v628 = vpack.c.b16 %v620, %v619
        %637 = vmatprep.subr.bf16.mxu0 0
        %638 = vmatpush1.bf16.msra.mxu0 %v621
        %639 = vmatprep.subr.bf16.mxu0 0
        %640 = vmatpush1.bf16.msra.mxu0 %v622
        %641 = vmatprep.subr.bf16.mxu0 0
        %642 = vmatpush1.bf16.msra.mxu0 %v623
        %643 = vmatprep.subr.bf16.mxu0 0
        %644 = vmatpush1.bf16.msra.mxu0 %v624
        %645 = vmatprep.subr.bf16.mxu0 0
        %646 = vmatpush1.bf16.msra.mxu0 %v625
        %647 = vmatprep.subr.bf16.mxu0 0
        %648 = vmatpush1.bf16.msra.mxu0 %v626
        %649 = vmatprep.subr.bf16.mxu0 0
        %650 = vmatpush1.bf16.msra.mxu0 %v627
        %651 = vmatprep.subr.bf16.mxu0 0
        %652 = vmatpush1.bf16.msra.mxu0 %v628
        %653 = vmatprep.subr.bf16.mxu0 0
        %654 = vmatpush1.bf16.msra.mxu0 0
        %655 = vmatprep.subr.bf16.mxu0 0
        %656 = vmatpush1.bf16.msra.mxu0 0
        %657 = vmatprep.subr.bf16.mxu0 0
        %658 = vmatpush1.bf16.msra.mxu0 0
        %659 = vmatprep.subr.bf16.mxu0 0
        %660 = vmatpush1.bf16.msra.mxu0 0
        %661 = vmatprep.subr.bf16.mxu0 0
        %662 = vmatpush1.bf16.msra.mxu0 0
        %663 = vmatprep.subr.bf16.mxu0 0
        %664 = vmatpush1.bf16.msra.mxu0 0
        %665 = vmatprep.subr.bf16.mxu0 0
        %666 = vmatpush1.bf16.msra.mxu0 0
        %667 = vmatprep.subr.bf16.mxu0 0
        %668 = vmatpush1.bf16.msra.mxu0 0
        %669 = vmatprep.mubr.bf16.mxu0 0
        %670 = vmatmul.mubr.bf16.gmra.mrb[0].mxu0 %v565
        %v671 = vpop.f32.mrb[0].mxu0
        %v672 = vadd.f32 %v587, %v671
        %v673 = vpop.f32.mrb[0].mxu0
        %v674 = vpop.f32.mrb[0].mxu0
        %v675 = vadd.f32 %v587, %v674
        %v676 = vpop.f32.mrb[0].mxu0
        %677 = vdwg.mxu0
        %v678 = vxor.u32 %v672, 2147483648
        %v679 = vxor.u32 %v675, 2147483648
        %v680 = vmul.f32 %v678, 1.442695
        %v681 = vpow.pop %v680
        %v682 = vmul.f32 %v679, 1.442695
        %v683 = vpow.pop %v682
        %v684 = vadd.f32 %v681, 1.0
        %v685 = vadd.f32 %v683, 1.0
        %v686 = vrcp.pop %v684
        %v687 = vmul.f32 1.0, %v686
        %v688 = vrcp.pop %v685
        %v689 = vmul.f32 1.0, %v688
        %v690 = vld [vmem:[#allocation13] sm:$0xf]
        %v691 = vld [vmem:[%s364] sm:$0xff]
        %v692 = vld [vmem:[%s364 + $0x8] sm:$0xff]
        %v693 = vlaneseq
        %v694 = vshrl.u32 %v693, 7
        %v695 = vsub.s32 0, %v694
        %v696 = vrot.slane %v690, %v695
        %698 = vset.pattern.permute.xlu0 0
        %699 = vperm.xlu0 %698, %v691
        %v700 = vpop.permute.xlu0 %699
        %703 = vset.pattern.permute.xlu0 0
        %704 = vperm.xlu0 %703, %v692
        %v705 = vpop.permute.xlu0 %704
        %v707 = vmul.f32 %v696, %v700
        %v708 = vmul.f32 %v696, %v705
        %v709 = vlaneseq
        %v710 = vshrl.u32 %v709, 7
        %v711 = vsub.s32 1, %v710
        %v712 = vrot.slane %v690, %v711
        %713 = vset.pattern.permute.xlu0 1
        %714 = vperm.xlu0 %713, %v691
        %v715 = vpop.permute.xlu0 %714
        %717 = vset.pattern.permute.xlu0 1
        %718 = vperm.xlu0 %717, %v692
        %v719 = vpop.permute.xlu0 %718
        %v721 = vmul.f32 %v712, %v715
        %v722 = vmul.f32 %v712, %v719
        %v723 = vadd.f32 %v707, %v721
        %v724 = vadd.f32 %v708, %v722
        %v725 = vmul.f32 %v687, 2.0
        %v726 = vmul.f32 %v689, 2.0
        %v727 = vadd.f32 %v725, %v723
        %v728 = vadd.f32 %v726, %v724
        %v729 = vsub.f32 %v727, 0.5
        %v730 = vsub.f32 %v728, 0.5
        %v731 = vmul.f32 %v729, 4.0
        %v732 = vmul.f32 %v730, 4.0
        %v733 = vmul.f32 %v725, %v725
        %v734 = vmul.f32 %v726, %v726
        %v735 = vlaneseq
        %v736 = vshrl.u32 %v735, 7
        %v737 = vsub.s32 3, %v736
        %v738 = vrot.slane %v690, %v737
        %v739 = vmul.f32 %v733, %v738
        %v740 = vmul.f32 %v734, %v738
        %v742 = vrot.slane %v690, 1
        %v744 = vadd.f32 %v690, %v742
        %vm745 = vcmp.gt.f32.partialorder %v744, 0.5
        %vm746 = vcmp.gt.f32.partialorder %v690, 0.5
        %v747 = vsel %vm746, 1, 0
        %v748 = vlaneseq
        %v749 = vshrl.u32 %v748, 7
        %v750 = vsub.s32 2, %v749
        %v751 = vrot.slane %v747, %v750
        %vm752 = vcmp.eq.s32.totalorder %v751, 1
        %v753 = vsel %vm752, %v739, %v687
        %v754 = vsel %vm752, %v740, %v689
        %v755 = vsel %vm745, 1, 0
        %v756 = vlaneseq
        %v757 = vshrl.u32 %v756, 7
        %v758 = vsub.s32 0, %v757
        %v759 = vrot.slane %v755, %v758
        %vm760 = vcmp.eq.s32.totalorder %v759, 1
        %v761 = vsel %vm760, %v731, %v753
        %v762 = vsel %vm760, %v732, %v754
        %vm763 = vcmask 220160
        %764 = vst.msk [vmem:[%s403] sm:$0xff] %vm763, %v761
        %765 = vst.msk [vmem:[%s403 + $0x8] sm:$0xff] %vm763, %v762
        %s766 = sand.u32 %s194, 1
        %s767 = scalar_lea.sflag [#allocation4], %s766
        %s768 = sand.u32 %s194, 1
        %s769 = smul.addr %s768, 16
        %s770 = scalar_lea.vmem [#allocation14], %s769
        // Predicated region
        $region77: #{a_call__.3} parent=47 // pred_check
          %p771 = pneg %p204
        $region78: #{a_call__.3} parent=47 // pred_check_branch
          %773 = sbr.rel (%p771) target = $region80
        $region79: #{a_call__.3} parent=47 // pred_region
          %s774 = smul.u32 2, %s29
          %s776 = ssub.s32 256, 256
          %777 = vsyncadd %s767, %s776
          %s778 = smul.addr %s774, 128
          %s779 = scalar_lea.hbm %s7, %s778
          %s780 = sshll.u32 %s770, 4
          %s781 = int_to_ptr.vmem [resolvable:$true] %s780
          %786 = dma.vmem_to_hbm [thread:$0]  %s781, 256, %s779, %s767, 128, 128, 8
        $region80: #{a_call__.3} parent=47 // pred_fallthru
          _
      $region48: #{a_call__.3} parent=5 // pred_fallthru
        _
      %p787 = scmp.le.s32.totalorder 2, %s24
      // Predicated region
      $region81: #{a_call__.3} parent=5 // pred_check
        %p788 = pneg %p787
      $region82: #{a_call__.3} parent=5 // pred_check_branch
        %790 = sbr.rel (%p788) target = $region84
      $region83: #{a_call__.3} parent=5 // pred_region
        %s791 = ssub.s32 %s24, 2
        // Predicated region
        $region85: #{a_call__.3} parent=83 // pred_check
          %p792 = pneg %p210
        $region86: #{a_call__.3} parent=83 // pred_check_branch
          %794 = sbr.rel (%p792) target = $region88
        $region87: #{a_call__.3} parent=83 // pred_region
          %s795 = sand.u32 %s195, 1
          %s796 = scalar_lea.sflag [#allocation4], %s795
          %s797 = sand.u32 %s195, 1
          %s798 = smul.addr %s797, 16
          %s799 = scalar_lea.vmem [#allocation14], %s798
          %800 = dma.done %s796, 256
        $region88: #{a_call__.3} parent=83 // pred_fallthru
          _
      $region84: #{a_call__.3} parent=5 // pred_fallthru
        _
    $region6: #{a_call__.3} parent=1 // loop_footer
      %s28 = sadd.s32 1, %s24
    $region7: #{a_call__.3} parent=1 // loop_footer_branch
      %23 = sbr.rel target = $region3
    $region8: #{a_call__.3} parent=1 // loop_exit
      _
    %801 = vsyncpa [#allocation3], 1
    %s802 = scalar_lea.sflag [#allocation3], 1
    %803 = vsyncpa %s802, 1
    %804 = vsyncpa [#allocation6], 1
    %805 = vsyncpa [#allocation9], 1
    %806 = vsyncpa [#allocation12], 1
    %s807 = scalar_lea.sflag [#allocation12], 1
    %808 = vsyncpa %s807, 1
    %809 = vsyncpa [#allocation4], 1
    %s810 = scalar_lea.sflag [#allocation4], 1
    %811 = vsyncpa %s810, 1

</llo_original>
